<compile_context>
chip_gen: v6e
topology: v6e:2x2x1
jax: 0.10.0
libtpu: 0.0.40
codegen_flags: <defaults>
</compile_context>

<pallas_src>
import jax
import jax.numpy as jnp
from jax.experimental import pallas as pl
from jax.experimental.pallas import tpu as pltpu

STARTING_DIM = 784
IN_PAD = 896            # 7 * 128, zero-padded K for fc1 (exact)
HIDDEN = 256
N_CLASSIFIERS = 5
N_CLASSES = 2
CLF_PAD = 128           # lane-dense classifier output (sliced back to 2)
EPS_WIDTH = 2 * HIDDEN + CLF_PAD   # packed eps slab width = 640


def _round_up(n, m):
    return -(-n // m) * m


def _max_batch_tile():
    """256 matches the 2x256^2 MXU on v6e/v7x; 128 matches v5e's 128^2 tiles."""
    try:
        kind = jax.devices()[0].device_kind.lower()
        if "v5 lite" in kind or "v5e" in kind or "v5litepod" in kind:
            return 128
    except Exception:
        pass
    return 256


MAX_TB = _max_batch_tile()


# --------------------------------------------------------------------------
# Kernel
# --------------------------------------------------------------------------
def _bbb_layer(x_bf16, w_ref, b_ref, eps, d_out, apply_relu):
    """One BBBLinear layer: two bf16 MXU dots, f32 accumulate + epilogue."""
    w_mu = w_ref[:, :d_out]          # (D_in, d_out) bf16
    w_var = w_ref[:, d_out:]         # (D_in, d_out) bf16
    b_mu = b_ref[:, :d_out]          # (1, d_out)    f32
    b_var = b_ref[:, d_out:]         # (1, d_out)    f32  (1e-16 folded in)
    act_mu = jnp.dot(x_bf16, w_mu, preferred_element_type=jnp.float32) + b_mu
    act_var = jnp.dot(x_bf16 * x_bf16, w_var,
                      preferred_element_type=jnp.float32) + b_var
    out = act_mu + jnp.sqrt(act_var) * eps
    if apply_relu:
        out = jnp.maximum(out, 0.0)
    return out


def split_model_kernel(x_ref,
                       w1_ref, b1_ref,
                       w2_ref, b2_ref,
                       w3_ref, b3_ref,
                       eps_ref,
                       out_ref):
    """Fused: relu(fc1(x)) -> relu(fc2(.)) -> classifiers[task_id](.)."""
    eps1 = eps_ref[:, :HIDDEN]
    eps2 = eps_ref[:, HIDDEN:2 * HIDDEN]
    eps3 = eps_ref[:, 2 * HIDDEN:]
    h = _bbb_layer(x_ref[...], w1_ref, b1_ref, eps1, HIDDEN, apply_relu=True)
    h = _bbb_layer(h.astype(jnp.bfloat16), w2_ref, b2_ref, eps2, HIDDEN,
                   apply_relu=True)
    out_ref[...] = _bbb_layer(h.astype(jnp.bfloat16), w3_ref, b3_ref, eps3,
                              CLF_PAD, apply_relu=False)


# --------------------------------------------------------------------------
# Wrapper (whole forward is one jitted executable)
# --------------------------------------------------------------------------
@jax.jit
def _forward_impl(x, fc1_w, fc1_b, fc2_w, fc2_b, clf_w, clf_b, key):
    out = x.reshape(-1, STARTING_DIM).astype(jnp.float32)
    batch = out.shape[0]

    # Static (trace-time) batch tiling: pad rows to a multiple of the tile.
    b_pad = _round_up(max(batch, 8), 8)
    tb = min(MAX_TB, b_pad)
    b_pad = _round_up(b_pad, tb)
    grid = (b_pad // tb,)

    x_p = jnp.pad(out, ((0, b_pad - batch), (0, IN_PAD - STARTING_DIM)))
    x_p = x_p.astype(jnp.bfloat16)

    # TODO(synk): torch's CPU/GPU RNG stream cannot be reproduced bit-exactly;
    # eps ~ N(0,1) comes from JAX's threefry PRNG (same distribution).
    eps = jax.random.normal(key, (b_pad, EPS_WIDTH), jnp.float32)

    const = lambda i: (0, 0)        # weights/biases stay resident across steps
    row = lambda i: (i, 0)          # batch-tiled arrays

    out_full = pl.pallas_call(
        split_model_kernel,
        out_shape=jax.ShapeDtypeStruct((b_pad, CLF_PAD), jnp.float32),
        grid=grid,
        in_specs=[
            pl.BlockSpec((tb, IN_PAD), row),               # x
            pl.BlockSpec((IN_PAD, 2 * HIDDEN), const),     # fc1 [Wmu|Wvar]
            pl.BlockSpec((1, 2 * HIDDEN), const),          # fc1 [bmu|bvar]
            pl.BlockSpec((HIDDEN, 2 * HIDDEN), const),     # fc2 [Wmu|Wvar]
            pl.BlockSpec((1, 2 * HIDDEN), const),          # fc2 [bmu|bvar]
            pl.BlockSpec((HIDDEN, 2 * CLF_PAD), const),    # clf [Wmu|Wvar]
            pl.BlockSpec((1, 2 * CLF_PAD), const),         # clf [bmu|bvar]
            pl.BlockSpec((tb, EPS_WIDTH), row),            # eps (packed)
        ],
        out_specs=pl.BlockSpec((tb, CLF_PAD), row),
        compiler_params=pltpu.CompilerParams(
            dimension_semantics=("parallel",)),
    )(x_p, fc1_w, fc1_b, fc2_w, fc2_b, clf_w, clf_b, eps)

    return out_full[:batch, :N_CLASSES]


def split_model_forward(x, prepared_params, task_id, key):
    """SplitModel.forward(x, task_id) with sampled (reparameterized) noise.

    task_id is a static Python int (indexes a Python list, like the
    nn.ModuleList in the reference). `key` controls the eps draws.
    """
    fc1_w, fc1_b = prepared_params["fc1"]
    fc2_w, fc2_b = prepared_params["fc2"]
    clf_w, clf_b = prepared_params["classifiers"][task_id]
    return _forward_impl(x, fc1_w, fc1_b, fc2_w, fc2_b, clf_w, clf_b, key)


# --------------------------------------------------------------------------
# Parameter init (matches BBBLinear.reset_parameters) and one-time prep
# --------------------------------------------------------------------------
def init_bbb_params(key, d_in, d_out):
    """W_mu ~ N(0, 0.1), W_rho = -3; same for bias. Torch layout (out, in)."""
    k_w, k_b = jax.random.split(key)
    w_mu = 0.1 * jax.random.normal(k_w, (d_out, d_in), jnp.float32)
    w_rho = jnp.full((d_out, d_in), -3.0, jnp.float32)
    b_mu = 0.1 * jax.random.normal(k_b, (d_out,), jnp.float32)
    b_rho = jnp.full((d_out,), -3.0, jnp.float32)
    return (w_mu, w_rho, b_mu, b_rho)


def init_split_model(key, starting_dim=STARTING_DIM):
    keys = jax.random.split(key, 2 + N_CLASSIFIERS)
    return {
        "fc1": init_bbb_params(keys[0], starting_dim, HIDDEN),
        "fc2": init_bbb_params(keys[1], HIDDEN, HIDDEN),
        "classifiers": [
            init_bbb_params(keys[2 + i], HIDDEN, N_CLASSES)
            for i in range(N_CLASSIFIERS)
        ],
    }


def _prepare_layer(w_mu, w_rho, b_mu, b_rho, pad_in_to=None, pad_out_to=None):
    """Kernel-ready tensors: transposed + padded + packed, bf16 weight slab."""
    d_out, d_in = w_mu.shape
    w_sigma = jax.nn.softplus(w_rho)          # numerically stable softplus
    b_sigma = jax.nn.softplus(b_rho)
    w_mu_t = jnp.transpose(w_mu)                            # (d_in, d_out)
    w_var_t = jnp.transpose(w_sigma * w_sigma)              # (d_in, d_out)
    b_mu_r = b_mu.reshape(1, d_out)
    b_var_r = (1e-16 + b_sigma * b_sigma).reshape(1, d_out)
    if pad_in_to is not None and pad_in_to > d_in:          # zero-pad K (exact)
        pad = pad_in_to - d_in
        w_mu_t = jnp.pad(w_mu_t, ((0, pad), (0, 0)))
        w_var_t = jnp.pad(w_var_t, ((0, pad), (0, 0)))
    if pad_out_to is not None and pad_out_to > d_out:       # lane-pad N
        pad = pad_out_to - d_out
        w_mu_t = jnp.pad(w_mu_t, ((0, 0), (0, pad)))
        w_var_t = jnp.pad(w_var_t, ((0, 0), (0, pad)))
        b_mu_r = jnp.pad(b_mu_r, ((0, 0), (0, pad)))
        b_var_r = jnp.pad(b_var_r, ((0, 0), (0, pad)))
    w_packed = jnp.concatenate([w_mu_t, w_var_t], axis=1).astype(jnp.bfloat16)
    b_packed = jnp.concatenate([b_mu_r, b_var_r], axis=1).astype(jnp.float32)
    return w_packed, b_packed


def prepare_split_model(params):
    """Run once (per param update): hoists softplus/transpose/pack/cast."""
    return {
        "fc1": _prepare_layer(*params["fc1"], pad_in_to=IN_PAD),
        "fc2": _prepare_layer(*params["fc2"]),
        "classifiers": [
            _prepare_layer(*p, pad_out_to=CLF_PAD)
            for p in params["classifiers"]
        ],
    }


# --------------------------------------------------------------------------
# Pure-JAX f32 reference (same math + same eps draw) for validation
# --------------------------------------------------------------------------
def _reference_forward(x, params, task_id, key):
    out = x.reshape(-1, STARTING_DIM).astype(jnp.float32)
    batch = out.shape[0]
    b_pad = _round_up(max(batch, 8), 8)
    tb = min(MAX_TB, b_pad)
    b_pad = _round_up(b_pad, tb)
    eps_all = jax.random.normal(key, (b_pad, EPS_WIDTH), jnp.float32)[:batch]
    eps = [eps_all[:, :HIDDEN],
           eps_all[:, HIDDEN:2 * HIDDEN],
           eps_all[:, 2 * HIDDEN:2 * HIDDEN + N_CLASSES]]

    def layer(h, p, e, relu):
        w_mu, w_rho, b_mu, b_rho = p
        w_sig = jax.nn.softplus(w_rho)
        b_sig = jax.nn.softplus(b_rho)
        mu = h @ w_mu.T + b_mu
        var = 1e-16 + (h * h) @ (w_sig * w_sig).T + b_sig * b_sig
        o = mu + jnp.sqrt(var) * e
        return jnp.maximum(o, 0.0) if relu else o

    h = layer(out, params["fc1"], eps[0], True)
    h = layer(h, params["fc2"], eps[1], True)
    return layer(h, params["classifiers"][task_id], eps[2], False)


# --------------------------------------------------------------------------
# Demo
# --------------------------------------------------------------------------
if __name__ == "__main__":
    key = jax.random.PRNGKey(0)
    k_params, k_x, k_noise = jax.random.split(key, 3)

    params = init_split_model(k_params)
    prepared = prepare_split_model(params)

    batch = 2
    x = jax.random.normal(k_x, (batch, 1, 28, 28), jnp.float32)  # NCHW input
    task_id = 3

    out = split_model_forward(x, prepared, task_id, k_noise)
    out = jax.block_until_ready(out)

    assert out.shape == (batch, N_CLASSES), out.shape
    assert out.dtype == jnp.float32, out.dtype
    assert bool(jnp.all(jnp.isfinite(out)))

    # Validate the bf16 MXU path against the f32 reference (same eps draw).
    ref = _reference_forward(x, params, task_id, k_noise)
    err = float(jnp.max(jnp.abs(out - ref)))
    tol = 0.05 * (1.0 + float(jnp.max(jnp.abs(ref))))
    assert err < tol, f"max abs err {err} vs tol {tol}"

    print("KERNEL_OK")
</pallas_src>

<mosaic_0001>
module attributes {stable_mosaic.version = 11 : i64} {
  func.func @split_model_kernel(%arg0: i32, %arg1: memref<8x896xbf16, #tpu.memory_space<vmem>>, %arg2: memref<896x512xbf16, #tpu.memory_space<vmem>>, %arg3: memref<1x512xf32, #tpu.memory_space<vmem>>, %arg4: memref<256x512xbf16, #tpu.memory_space<vmem>>, %arg5: memref<1x512xf32, #tpu.memory_space<vmem>>, %arg6: memref<256x256xbf16, #tpu.memory_space<vmem>>, %arg7: memref<1x256xf32, #tpu.memory_space<vmem>>, %arg8: memref<8x640xf32, #tpu.memory_space<vmem>>, %arg9: memref<8x128xf32, #tpu.memory_space<vmem>>) attributes {dimension_semantics = [#tpu.dimension_semantics<parallel>], iteration_bounds = array<i64: 1>, scalar_prefetch = 0 : i64, scratch_operands = 0 : i64, tpu.core_type = #tpu.core_type<tc>, window_params = [{transform_indices = @transform_0, window_bounds = array<i64: 8, 896>}, {pipeline_mode = #tpu.pipeline_mode<synchronous>, transform_indices = @transform_1, window_bounds = array<i64: 896, 512>}, {pipeline_mode = #tpu.pipeline_mode<synchronous>, transform_indices = @transform_2, window_bounds = array<i64: 1, 512>}, {pipeline_mode = #tpu.pipeline_mode<synchronous>, transform_indices = @transform_3, window_bounds = array<i64: 256, 512>}, {pipeline_mode = #tpu.pipeline_mode<synchronous>, transform_indices = @transform_4, window_bounds = array<i64: 1, 512>}, {pipeline_mode = #tpu.pipeline_mode<synchronous>, transform_indices = @transform_5, window_bounds = array<i64: 256, 256>}, {pipeline_mode = #tpu.pipeline_mode<synchronous>, transform_indices = @transform_6, window_bounds = array<i64: 1, 256>}, {transform_indices = @transform_7, window_bounds = array<i64: 8, 640>}, {transform_indices = @transform_8, window_bounds = array<i64: 8, 128>}]} {
    %c0 = arith.constant 0 : index
    %c0_0 = arith.constant 0 : index
    %0 = vector.load %arg8[%c0, %c0_0] : memref<8x640xf32, #tpu.memory_space<vmem>>, vector<8x256xf32>
    %c0_1 = arith.constant 0 : index
    %c256 = arith.constant 256 : index
    %1 = vector.load %arg8[%c0_1, %c256] : memref<8x640xf32, #tpu.memory_space<vmem>>, vector<8x256xf32>
    %c0_2 = arith.constant 0 : index
    %c512 = arith.constant 512 : index
    %2 = vector.load %arg8[%c0_2, %c512] : memref<8x640xf32, #tpu.memory_space<vmem>>, vector<8x128xf32>
    %c0_3 = arith.constant 0 : index
    %c0_4 = arith.constant 0 : index
    %3 = vector.load %arg1[%c0_3, %c0_4] : memref<8x896xbf16, #tpu.memory_space<vmem>>, vector<8x896xbf16>
    %c0_5 = arith.constant 0 : index
    %c0_6 = arith.constant 0 : index
    %4 = vector.load %arg2[%c0_5, %c0_6] : memref<896x512xbf16, #tpu.memory_space<vmem>>, vector<896x256xbf16>
    %c0_7 = arith.constant 0 : index
    %c256_8 = arith.constant 256 : index
    %5 = vector.load %arg2[%c0_7, %c256_8] : memref<896x512xbf16, #tpu.memory_space<vmem>>, vector<896x256xbf16>
    %c0_9 = arith.constant 0 : index
    %c0_10 = arith.constant 0 : index
    %6 = vector.load %arg3[%c0_9, %c0_10] : memref<1x512xf32, #tpu.memory_space<vmem>>, vector<1x256xf32>
    %c0_11 = arith.constant 0 : index
    %c256_12 = arith.constant 256 : index
    %7 = vector.load %arg3[%c0_11, %c256_12] : memref<1x512xf32, #tpu.memory_space<vmem>>, vector<1x256xf32>
    %cst = arith.constant dense<0.000000e+00> : vector<8x256xf32>
    %8 = tpu.matmul %3, %4, %cst {dimension_numbers = #tpu.dot_dimension_numbers<[1], [0], [0], [1], [0, 0, 1, 1], [], []>} : vector<8x896xbf16>, vector<896x256xbf16>, vector<8x256xf32> -> vector<8x256xf32>
    %9 = vector.broadcast %6 : vector<1x256xf32> to vector<8x256xf32>
    %10 = arith.addf %8, %9 : vector<8x256xf32>
    %11 = arith.mulf %3, %3 : vector<8x896xbf16>
    %cst_13 = arith.constant dense<0.000000e+00> : vector<8x256xf32>
    %12 = tpu.matmul %11, %5, %cst_13 {dimension_numbers = #tpu.dot_dimension_numbers<[1], [0], [0], [1], [0, 0, 1, 1], [], []>} : vector<8x896xbf16>, vector<896x256xbf16>, vector<8x256xf32> -> vector<8x256xf32>
    %13 = vector.broadcast %7 : vector<1x256xf32> to vector<8x256xf32>
    %14 = arith.addf %12, %13 : vector<8x256xf32>
    %15 = math.sqrt %14 : vector<8x256xf32>
    %16 = arith.mulf %15, %0 : vector<8x256xf32>
    %17 = arith.addf %10, %16 : vector<8x256xf32>
    %cst_14 = arith.constant 0.000000e+00 : f32
    %18 = vector.broadcast %cst_14 : f32 to vector<8x256xf32>
    %19 = arith.maximumf %17, %18 : vector<8x256xf32>
    %20 = arith.truncf %19 : vector<8x256xf32> to vector<8x256xbf16>
    %c0_15 = arith.constant 0 : index
    %c0_16 = arith.constant 0 : index
    %21 = vector.load %arg4[%c0_15, %c0_16] : memref<256x512xbf16, #tpu.memory_space<vmem>>, vector<256x256xbf16>
    %c0_17 = arith.constant 0 : index
    %c256_18 = arith.constant 256 : index
    %22 = vector.load %arg4[%c0_17, %c256_18] : memref<256x512xbf16, #tpu.memory_space<vmem>>, vector<256x256xbf16>
    %c0_19 = arith.constant 0 : index
    %c0_20 = arith.constant 0 : index
    %23 = vector.load %arg5[%c0_19, %c0_20] : memref<1x512xf32, #tpu.memory_space<vmem>>, vector<1x256xf32>
    %c0_21 = arith.constant 0 : index
    %c256_22 = arith.constant 256 : index
    %24 = vector.load %arg5[%c0_21, %c256_22] : memref<1x512xf32, #tpu.memory_space<vmem>>, vector<1x256xf32>
    %cst_23 = arith.constant dense<0.000000e+00> : vector<8x256xf32>
    %25 = tpu.matmul %20, %21, %cst_23 {dimension_numbers = #tpu.dot_dimension_numbers<[1], [0], [0], [1], [0, 0, 1, 1], [], []>} : vector<8x256xbf16>, vector<256x256xbf16>, vector<8x256xf32> -> vector<8x256xf32>
    %26 = vector.broadcast %23 : vector<1x256xf32> to vector<8x256xf32>
    %27 = arith.addf %25, %26 : vector<8x256xf32>
    %28 = arith.mulf %20, %20 : vector<8x256xbf16>
    %cst_24 = arith.constant dense<0.000000e+00> : vector<8x256xf32>
    %29 = tpu.matmul %28, %22, %cst_24 {dimension_numbers = #tpu.dot_dimension_numbers<[1], [0], [0], [1], [0, 0, 1, 1], [], []>} : vector<8x256xbf16>, vector<256x256xbf16>, vector<8x256xf32> -> vector<8x256xf32>
    %30 = vector.broadcast %24 : vector<1x256xf32> to vector<8x256xf32>
    %31 = arith.addf %29, %30 : vector<8x256xf32>
    %32 = math.sqrt %31 : vector<8x256xf32>
    %33 = arith.mulf %32, %1 : vector<8x256xf32>
    %34 = arith.addf %27, %33 : vector<8x256xf32>
    %cst_25 = arith.constant 0.000000e+00 : f32
    %35 = vector.broadcast %cst_25 : f32 to vector<8x256xf32>
    %36 = arith.maximumf %34, %35 : vector<8x256xf32>
    %37 = arith.truncf %36 : vector<8x256xf32> to vector<8x256xbf16>
    %c0_26 = arith.constant 0 : index
    %c0_27 = arith.constant 0 : index
    %38 = vector.load %arg6[%c0_26, %c0_27] : memref<256x256xbf16, #tpu.memory_space<vmem>>, vector<256x128xbf16>
    %c0_28 = arith.constant 0 : index
    %c128 = arith.constant 128 : index
    %39 = vector.load %arg6[%c0_28, %c128] : memref<256x256xbf16, #tpu.memory_space<vmem>>, vector<256x128xbf16>
    %c0_29 = arith.constant 0 : index
    %c0_30 = arith.constant 0 : index
    %40 = vector.load %arg7[%c0_29, %c0_30] : memref<1x256xf32, #tpu.memory_space<vmem>>, vector<1x128xf32>
    %c0_31 = arith.constant 0 : index
    %c128_32 = arith.constant 128 : index
    %41 = vector.load %arg7[%c0_31, %c128_32] : memref<1x256xf32, #tpu.memory_space<vmem>>, vector<1x128xf32>
    %cst_33 = arith.constant dense<0.000000e+00> : vector<8x128xf32>
    %42 = tpu.matmul %37, %38, %cst_33 {dimension_numbers = #tpu.dot_dimension_numbers<[1], [0], [0], [1], [0, 0, 1, 1], [], []>} : vector<8x256xbf16>, vector<256x128xbf16>, vector<8x128xf32> -> vector<8x128xf32>
    %43 = vector.broadcast %40 : vector<1x128xf32> to vector<8x128xf32>
    %44 = arith.addf %42, %43 : vector<8x128xf32>
    %45 = arith.mulf %37, %37 : vector<8x256xbf16>
    %cst_34 = arith.constant dense<0.000000e+00> : vector<8x128xf32>
    %46 = tpu.matmul %45, %39, %cst_34 {dimension_numbers = #tpu.dot_dimension_numbers<[1], [0], [0], [1], [0, 0, 1, 1], [], []>} : vector<8x256xbf16>, vector<256x128xbf16>, vector<8x128xf32> -> vector<8x128xf32>
    %47 = vector.broadcast %41 : vector<1x128xf32> to vector<8x128xf32>
    %48 = arith.addf %46, %47 : vector<8x128xf32>
    %49 = math.sqrt %48 : vector<8x128xf32>
    %50 = arith.mulf %49, %2 : vector<8x128xf32>
    %51 = arith.addf %44, %50 : vector<8x128xf32>
    %c0_35 = arith.constant 0 : index
    %c0_36 = arith.constant 0 : index
    %52 = vector.load %arg9[%c0_35, %c0_36] : memref<8x128xf32, #tpu.memory_space<vmem>>, vector<8x128xf32>
    tpu.vector_store %arg9[%c0_35, %c0_36], %51 {strides = array<i32>} : memref<8x128xf32, #tpu.memory_space<vmem>>, vector<8x128xf32>,
    return
  }
  func.func @transform_0(%arg0: i32) -> (i32, i32) {
    %c0_i32 = arith.constant 0 : i32
    %c0_i32_0 = arith.constant 0 : i32
    return %arg0, %c0_i32 : i32, i32
  }
  func.func @transform_1(%arg0: i32) -> (i32, i32) {
    %c0_i32 = arith.constant 0 : i32
    %c0_i32_0 = arith.constant 0 : i32
    %c0_i32_1 = arith.constant 0 : i32
    return %c0_i32, %c0_i32_0 : i32, i32
  }
  func.func @transform_2(%arg0: i32) -> (i32, i32) {
    %c0_i32 = arith.constant 0 : i32
    %c0_i32_0 = arith.constant 0 : i32
    %c0_i32_1 = arith.constant 0 : i32
    return %c0_i32, %c0_i32_0 : i32, i32
  }
  func.func @transform_3(%arg0: i32) -> (i32, i32) {
    %c0_i32 = arith.constant 0 : i32
    %c0_i32_0 = arith.constant 0 : i32
    %c0_i32_1 = arith.constant 0 : i32
    return %c0_i32, %c0_i32_0 : i32, i32
  }
  func.func @transform_4(%arg0: i32) -> (i32, i32) {
    %c0_i32 = arith.constant 0 : i32
    %c0_i32_0 = arith.constant 0 : i32
    %c0_i32_1 = arith.constant 0 : i32
    return %c0_i32, %c0_i32_0 : i32, i32
  }
  func.func @transform_5(%arg0: i32) -> (i32, i32) {
    %c0_i32 = arith.constant 0 : i32
    %c0_i32_0 = arith.constant 0 : i32
    %c0_i32_1 = arith.constant 0 : i32
    return %c0_i32, %c0_i32_0 : i32, i32
  }
  func.func @transform_6(%arg0: i32) -> (i32, i32) {
    %c0_i32 = arith.constant 0 : i32
    %c0_i32_0 = arith.constant 0 : i32
    %c0_i32_1 = arith.constant 0 : i32
    return %c0_i32, %c0_i32_0 : i32, i32
  }
  func.func @transform_7(%arg0: i32) -> (i32, i32) {
    %c0_i32 = arith.constant 0 : i32
    %c0_i32_0 = arith.constant 0 : i32
    return %arg0, %c0_i32 : i32, i32
  }
  func.func @transform_8(%arg0: i32) -> (i32, i32) {
    %c0_i32 = arith.constant 0 : i32
    %c0_i32_0 = arith.constant 0 : i32
    return %arg0, %c0_i32 : i32, i32
  }
}

</mosaic_0001>

<llo_original>
// kernel: _forward_impl.1
$region0: #{_forward_impl.1}
  #allocation0 [shape = 'u32[]', space=smem, size = 0x4, offset = 0x4, fixed_abs, tag = 'smem constant byte address 0x4 - core index']
  #allocation1 [shape = 'u32[144,128]{1,0:T(1,128)}', space=vmem, size = 0x12000, scoped, tag = 'internal scratch']
  %s0 = inlined_call_operand.vmem [shape: bf16[8,896], index: 0, kind: input, shape index: {}]
  %s1 = inlined_call_operand.hbm [shape: bf16[896,512], index: 1, kind: input, shape index: {}]
  %s2 = inlined_call_operand.vmem [shape: f32[1,512], index: 2, kind: input, shape index: {}]
  %s3 = inlined_call_operand.hbm [shape: bf16[256,512], index: 3, kind: input, shape index: {}]
  %s4 = inlined_call_operand.vmem [shape: f32[1,512], index: 4, kind: input, shape index: {}]
  %s5 = inlined_call_operand.hbm [shape: bf16[256,256], index: 5, kind: input, shape index: {}]
  %s6 = inlined_call_operand.vmem [shape: f32[1,256], index: 6, kind: input, shape index: {}]
  %s7 = inlined_call_operand.vmem [shape: f32[8,640], index: 7, kind: input, shape index: {}]
  %s8 = inlined_call_operand.vmem [shape: f32[8,128], index: 8, kind: output, shape index: {}]
  %s9 = sld [smem:[#allocation0]]
  $region54: #{_forward_impl.1} parent=0
    _
  %s11 = ssub.s32 1, %s9
  %s12 = scalar_select 0, %s11, %s9
  $region1: #{_forward_impl.1} parent=0
    #allocation2 [shape = 'u8[917504]{0}', space=vmem, size = 0xe0000, scoped, tag = 'input window, operand 1, single buffered']
    #allocation3 [shape = 's32[1]{0}', space=sflag, size = 0x4, scoped, tag = 'scoped memory for _forward_impl.1']
    #allocation4 [shape = 'u8[262144]{0}', space=vmem, size = 0x40000, scoped, tag = 'input window, operand 3, single buffered']
    #allocation5 [shape = 's32[1]{0}', space=sflag, size = 0x4, scoped, tag = 'scoped memory for _forward_impl.1']
    #allocation6 [shape = 'u8[131072]{0}', space=vmem, size = 0x20000, scoped, tag = 'input window, operand 5, single buffered']
    %13 = vsyncpa [#allocation3], 0
    %14 = vsyncpa [#allocation5], 0
    // Predicated region
    $region2: #{_forward_impl.1} parent=1 // pred_check
      _
    $region3: #{_forward_impl.1} parent=1 // pred_check_branch
      %16 = sbr.rel (0) target = $region5
    $region4: #{_forward_impl.1} parent=1 // pred_region
      _
    $region5: #{_forward_impl.1} parent=1 // pred_fallthru
      _
    // Predicated region
    $region6: #{_forward_impl.1} parent=1 // pred_check
      _
    $region7: #{_forward_impl.1} parent=1 // pred_check_branch
      %18 = sbr.rel (0) target = $region9
    $region8: #{_forward_impl.1} parent=1 // pred_region
      %s20 = ssub.s32 28672, 28672
      %21 = vsyncadd [#allocation3], %s20
      %s22 = sshll.u32 [#allocation2], 4
      %s23 = int_to_ptr.vmem [resolvable:$true] %s22
      %28 = dma.hbm_to_vmem [thread:$0]  %s1, 28672, %s23, [#allocation3], 256, 256, 16
    $region9: #{_forward_impl.1} parent=1 // pred_fallthru
      _
    // Predicated region
    $region10: #{_forward_impl.1} parent=1 // pred_check
      _
    $region11: #{_forward_impl.1} parent=1 // pred_check_branch
      %30 = sbr.rel (0) target = $region13
    $region12: #{_forward_impl.1} parent=1 // pred_region
      _
    $region13: #{_forward_impl.1} parent=1 // pred_fallthru
      _
    // Predicated region
    $region14: #{_forward_impl.1} parent=1 // pred_check
      _
    $region15: #{_forward_impl.1} parent=1 // pred_check_branch
      %32 = sbr.rel (0) target = $region17
    $region16: #{_forward_impl.1} parent=1 // pred_region
      %s34 = ssub.s32 8192, 8192
      %35 = vsyncadd [#allocation5], %s34
      %s36 = sshll.u32 [#allocation4], 4
      %s37 = int_to_ptr.vmem [resolvable:$true] %s36
      %42 = dma.hbm_to_vmem [thread:$0]  %s3, 8192, %s37, [#allocation5], 256, 256, 16
    $region17: #{_forward_impl.1} parent=1 // pred_fallthru
      _
    // Predicated region
    $region18: #{_forward_impl.1} parent=1 // pred_check
      _
    $region19: #{_forward_impl.1} parent=1 // pred_check_branch
      %44 = sbr.rel (0) target = $region21
    $region20: #{_forward_impl.1} parent=1 // pred_region
      _
    $region21: #{_forward_impl.1} parent=1 // pred_fallthru
      _
    // Predicated region
    $region22: #{_forward_impl.1} parent=1 // pred_check
      _
    $region23: #{_forward_impl.1} parent=1 // pred_check_branch
      %46 = sbr.rel (0) target = $region25
    $region24: #{_forward_impl.1} parent=1 // pred_region
      %s48 = ssub.s32 4096, 4096
      %49 = vsyncadd [#allocation5], %s48
      %s50 = sshll.u32 [#allocation6], 4
      %s51 = int_to_ptr.vmem [resolvable:$true] %s50
      %56 = dma.hbm_to_vmem [thread:$0]  %s5, 4096, %s51, [#allocation5], 128, 128, 8
    $region25: #{_forward_impl.1} parent=1 // pred_fallthru
      _
    // Predicated region
    $region26: #{_forward_impl.1} parent=1 // pred_check
      _
    $region27: #{_forward_impl.1} parent=1 // pred_check_branch
      %58 = sbr.rel (0) target = $region29
    $region28: #{_forward_impl.1} parent=1 // pred_region
      _
    $region29: #{_forward_impl.1} parent=1 // pred_fallthru
      _
    // Predicated region
    $region30: #{_forward_impl.1} parent=1 // pred_check
      _
    $region31: #{_forward_impl.1} parent=1 // pred_check_branch
      %60 = sbr.rel (0) target = $region33
    $region32: #{_forward_impl.1} parent=1 // pred_region
      _
    $region33: #{_forward_impl.1} parent=1 // pred_fallthru
      _
    // Predicated region
    $region34: #{_forward_impl.1} parent=1 // pred_check
      _
    $region35: #{_forward_impl.1} parent=1 // pred_check_branch
      %62 = sbr.rel (0) target = $region37
    $region36: #{_forward_impl.1} parent=1 // pred_region
      %63 = dma.done [#allocation3], 28672
    $region37: #{_forward_impl.1} parent=1 // pred_fallthru
      _
    // Predicated region
    $region38: #{_forward_impl.1} parent=1 // pred_check
      _
    $region39: #{_forward_impl.1} parent=1 // pred_check_branch
      %65 = sbr.rel (0) target = $region41
    $region40: #{_forward_impl.1} parent=1 // pred_region
      %66 = dma.done [#allocation5], 8192
    $region41: #{_forward_impl.1} parent=1 // pred_fallthru
      _
    // Predicated region
    $region42: #{_forward_impl.1} parent=1 // pred_check
      _
    $region43: #{_forward_impl.1} parent=1 // pred_check_branch
      %68 = sbr.rel (0) target = $region45
    $region44: #{_forward_impl.1} parent=1 // pred_region
      %69 = dma.done [#allocation5], 4096
    $region45: #{_forward_impl.1} parent=1 // pred_fallthru
      _
    %v71 = vld [vmem:[%s7] sm:$0xff]
    %v72 = vld [vmem:[%s7 + $0x8] sm:$0xff]
    %v73 = vld [vmem:[%s7 + $0x10] sm:$0xff]
    %v74 = vld [vmem:[%s7 + $0x18] sm:$0xff]
    %v75 = vld [vmem:[%s7 + $0x20] sm:$0xff]
    %v76 = vld [vmem:[%s0] sm:$0xff]
    %v77 = vld [vmem:[%s0 + $0x8] sm:$0xff]
    %v78 = vld [vmem:[%s0 + $0x10] sm:$0xff]
    %v79 = vld [vmem:[%s0 + $0x18] sm:$0xf]
    %v80 = vld [vmem:[#allocation2] sm:$0xff]
    %v81 = vld [vmem:[#allocation2 + $0x10] sm:$0xff]
    %v82 = vld [vmem:[#allocation2 + $0x20] sm:$0xff]
    %v83 = vld [vmem:[#allocation2 + $0x30] sm:$0xff]
    %v84 = vld [vmem:[#allocation2 + $0x40] sm:$0xff]
    %v85 = vld [vmem:[#allocation2 + $0x50] sm:$0xff]
    %v86 = vld [vmem:[#allocation2 + $0x60] sm:$0xff]
    %v87 = vld [vmem:[#allocation2 + $0x70] sm:$0xff]
    %v88 = vld [vmem:[#allocation2 + $0x80] sm:$0xff]
    %v89 = vld [vmem:[#allocation2 + $0x90] sm:$0xff]
    %v90 = vld [vmem:[#allocation2 + $0xa0] sm:$0xff]
    %v91 = vld [vmem:[#allocation2 + $0xb0] sm:$0xff]
    %v92 = vld [vmem:[#allocation2 + $0xc0] sm:$0xff]
    %v93 = vld [vmem:[#allocation2 + $0xd0] sm:$0xff]
    %v94 = vld [vmem:[#allocation2 + $0xe0] sm:$0xff]
    %v95 = vld [vmem:[#allocation2 + $0xf0] sm:$0xff]
    %v96 = vld [vmem:[#allocation2 + $0x100] sm:$0xff]
    %v97 = vld [vmem:[#allocation2 + $0x110] sm:$0xff]
    %v98 = vld [vmem:[#allocation2 + $0x120] sm:$0xff]
    %v99 = vld [vmem:[#allocation2 + $0x130] sm:$0xff]
    %v100 = vld [vmem:[#allocation2 + $0x140] sm:$0xff]
    %v101 = vld [vmem:[#allocation2 + $0x150] sm:$0xff]
    %v102 = vld [vmem:[#allocation2 + $0x160] sm:$0xff]
    %v103 = vld [vmem:[#allocation2 + $0x170] sm:$0xff]
    %v104 = vld [vmem:[#allocation2 + $0x180] sm:$0xff]
    %v105 = vld [vmem:[#allocation2 + $0x190] sm:$0xff]
    %v106 = vld [vmem:[#allocation2 + $0x1a0] sm:$0xff]
    %v107 = vld [vmem:[#allocation2 + $0x1b0] sm:$0xff]
    %v108 = vld [vmem:[#allocation2 + $0x1c0] sm:$0xff]
    %v109 = vld [vmem:[#allocation2 + $0x1d0] sm:$0xff]
    %v110 = vld [vmem:[#allocation2 + $0x1e0] sm:$0xff]
    %v111 = vld [vmem:[#allocation2 + $0x1f0] sm:$0xff]
    %v112 = vld [vmem:[#allocation2 + $0x200] sm:$0xff]
    %v113 = vld [vmem:[#allocation2 + $0x210] sm:$0xff]
    %v114 = vld [vmem:[#allocation2 + $0x220] sm:$0xff]
    %v115 = vld [vmem:[#allocation2 + $0x230] sm:$0xff]
    %v116 = vld [vmem:[#allocation2 + $0x240] sm:$0xff]
    %v117 = vld [vmem:[#allocation2 + $0x250] sm:$0xff]
    %v118 = vld [vmem:[#allocation2 + $0x260] sm:$0xff]
    %v119 = vld [vmem:[#allocation2 + $0x270] sm:$0xff]
    %v120 = vld [vmem:[#allocation2 + $0x280] sm:$0xff]
    %v121 = vld [vmem:[#allocation2 + $0x290] sm:$0xff]
    %v122 = vld [vmem:[#allocation2 + $0x2a0] sm:$0xff]
    %v123 = vld [vmem:[#allocation2 + $0x2b0] sm:$0xff]
    %v124 = vld [vmem:[#allocation2 + $0x2c0] sm:$0xff]
    %v125 = vld [vmem:[#allocation2 + $0x2d0] sm:$0xff]
    %v126 = vld [vmem:[#allocation2 + $0x2e0] sm:$0xff]
    %v127 = vld [vmem:[#allocation2 + $0x2f0] sm:$0xff]
    %v128 = vld [vmem:[#allocation2 + $0x300] sm:$0xff]
    %v129 = vld [vmem:[#allocation2 + $0x310] sm:$0xff]
    %v130 = vld [vmem:[#allocation2 + $0x320] sm:$0xff]
    %v131 = vld [vmem:[#allocation2 + $0x330] sm:$0xff]
    %v132 = vld [vmem:[#allocation2 + $0x340] sm:$0xff]
    %v133 = vld [vmem:[#allocation2 + $0x350] sm:$0xff]
    %v134 = vld [vmem:[#allocation2 + $0x360] sm:$0xff]
    %v135 = vld [vmem:[#allocation2 + $0x370] sm:$0xff]
    %v136 = vld [vmem:[#allocation2 + $0x380] sm:$0xff]
    %v137 = vld [vmem:[#allocation2 + $0x390] sm:$0xff]
    %v138 = vld [vmem:[#allocation2 + $0x3a0] sm:$0xff]
    %v139 = vld [vmem:[#allocation2 + $0x3b0] sm:$0xff]
    %v140 = vld [vmem:[#allocation2 + $0x3c0] sm:$0xff]
    %v141 = vld [vmem:[#allocation2 + $0x3d0] sm:$0xff]
    %v142 = vld [vmem:[#allocation2 + $0x3e0] sm:$0xff]
    %v143 = vld [vmem:[#allocation2 + $0x3f0] sm:$0xff]
    %v144 = vld [vmem:[#allocation2 + $0x400] sm:$0xff]
    %v145 = vld [vmem:[#allocation2 + $0x410] sm:$0xff]
    %v146 = vld [vmem:[#allocation2 + $0x420] sm:$0xff]
    %v147 = vld [vmem:[#allocation2 + $0x430] sm:$0xff]
    %v148 = vld [vmem:[#allocation2 + $0x440] sm:$0xff]
    %v149 = vld [vmem:[#allocation2 + $0x450] sm:$0xff]
    %v150 = vld [vmem:[#allocation2 + $0x460] sm:$0xff]
    %v151 = vld [vmem:[#allocation2 + $0x470] sm:$0xff]
    %v152 = vld [vmem:[#allocation2 + $0x480] sm:$0xff]
    %v153 = vld [vmem:[#allocation2 + $0x490] sm:$0xff]
    %v154 = vld [vmem:[#allocation2 + $0x4a0] sm:$0xff]
    %v155 = vld [vmem:[#allocation2 + $0x4b0] sm:$0xff]
    %v156 = vld [vmem:[#allocation2 + $0x4c0] sm:$0xff]
    %v157 = vld [vmem:[#allocation2 + $0x4d0] sm:$0xff]
    %v158 = vld [vmem:[#allocation2 + $0x4e0] sm:$0xff]
    %v159 = vld [vmem:[#allocation2 + $0x4f0] sm:$0xff]
    %v160 = vld [vmem:[#allocation2 + $0x500] sm:$0xff]
    %v161 = vld [vmem:[#allocation2 + $0x510] sm:$0xff]
    %v162 = vld [vmem:[#allocation2 + $0x520] sm:$0xff]
    %v163 = vld [vmem:[#allocation2 + $0x530] sm:$0xff]
    %v164 = vld [vmem:[#allocation2 + $0x540] sm:$0xff]
    %v165 = vld [vmem:[#allocation2 + $0x550] sm:$0xff]
    %v166 = vld [vmem:[#allocation2 + $0x560] sm:$0xff]
    %v167 = vld [vmem:[#allocation2 + $0x570] sm:$0xff]
    %v168 = vld [vmem:[#allocation2 + $0x580] sm:$0xff]
    %v169 = vld [vmem:[#allocation2 + $0x590] sm:$0xff]
    %v170 = vld [vmem:[#allocation2 + $0x5a0] sm:$0xff]
    %v171 = vld [vmem:[#allocation2 + $0x5b0] sm:$0xff]
    %v172 = vld [vmem:[#allocation2 + $0x5c0] sm:$0xff]
    %v173 = vld [vmem:[#allocation2 + $0x5d0] sm:$0xff]
    %v174 = vld [vmem:[#allocation2 + $0x5e0] sm:$0xff]
    %v175 = vld [vmem:[#allocation2 + $0x5f0] sm:$0xff]
    %v176 = vld [vmem:[#allocation2 + $0x600] sm:$0xff]
    %v177 = vld [vmem:[#allocation2 + $0x610] sm:$0xff]
    %v178 = vld [vmem:[#allocation2 + $0x620] sm:$0xff]
    %v179 = vld [vmem:[#allocation2 + $0x630] sm:$0xff]
    %v180 = vld [vmem:[#allocation2 + $0x640] sm:$0xff]
    %v181 = vld [vmem:[#allocation2 + $0x650] sm:$0xff]
    %v182 = vld [vmem:[#allocation2 + $0x660] sm:$0xff]
    %v183 = vld [vmem:[#allocation2 + $0x670] sm:$0xff]
    %v184 = vld [vmem:[#allocation2 + $0x680] sm:$0xff]
    %v185 = vld [vmem:[#allocation2 + $0x690] sm:$0xff]
    %v186 = vld [vmem:[#allocation2 + $0x6a0] sm:$0xff]
    %v187 = vld [vmem:[#allocation2 + $0x6b0] sm:$0xff]
    %v188 = vld [vmem:[#allocation2 + $0x6c0] sm:$0xff]
    %v189 = vld [vmem:[#allocation2 + $0x6d0] sm:$0xff]
    %v190 = vld [vmem:[#allocation2 + $0x6e0] sm:$0xff]
    %v191 = vld [vmem:[#allocation2 + $0x6f0] sm:$0xff]
    %v192 = vld [vmem:[#allocation2 + $0x8] sm:$0xff]
    %v193 = vld [vmem:[#allocation2 + $0x18] sm:$0xff]
    %v194 = vld [vmem:[#allocation2 + $0x28] sm:$0xff]
    %v195 = vld [vmem:[#allocation2 + $0x38] sm:$0xff]
    %v196 = vld [vmem:[#allocation2 + $0x48] sm:$0xff]
    %v197 = vld [vmem:[#allocation2 + $0x58] sm:$0xff]
    %v198 = vld [vmem:[#allocation2 + $0x68] sm:$0xff]
    %v199 = vld [vmem:[#allocation2 + $0x78] sm:$0xff]
    %v200 = vld [vmem:[#allocation2 + $0x88] sm:$0xff]
    %v201 = vld [vmem:[#allocation2 + $0x98] sm:$0xff]
    %v202 = vld [vmem:[#allocation2 + $0xa8] sm:$0xff]
    %v203 = vld [vmem:[#allocation2 + $0xb8] sm:$0xff]
    %v204 = vld [vmem:[#allocation2 + $0xc8] sm:$0xff]
    %v205 = vld [vmem:[#allocation2 + $0xd8] sm:$0xff]
    %v206 = vld [vmem:[#allocation2 + $0xe8] sm:$0xff]
    %v207 = vld [vmem:[#allocation2 + $0xf8] sm:$0xff]
    %v208 = vld [vmem:[#allocation2 + $0x108] sm:$0xff]
    %v209 = vld [vmem:[#allocation2 + $0x118] sm:$0xff]
    %v210 = vld [vmem:[#allocation2 + $0x128] sm:$0xff]
    %v211 = vld [vmem:[#allocation2 + $0x138] sm:$0xff]
    %v212 = vld [vmem:[#allocation2 + $0x148] sm:$0xff]
    %v213 = vld [vmem:[#allocation2 + $0x158] sm:$0xff]
    %v214 = vld [vmem:[#allocation2 + $0x168] sm:$0xff]
    %v215 = vld [vmem:[#allocation2 + $0x178] sm:$0xff]
    %v216 = vld [vmem:[#allocation2 + $0x188] sm:$0xff]
    %v217 = vld [vmem:[#allocation2 + $0x198] sm:$0xff]
    %v218 = vld [vmem:[#allocation2 + $0x1a8] sm:$0xff]
    %v219 = vld [vmem:[#allocation2 + $0x1b8] sm:$0xff]
    %v220 = vld [vmem:[#allocation2 + $0x1c8] sm:$0xff]
    %v221 = vld [vmem:[#allocation2 + $0x1d8] sm:$0xff]
    %v222 = vld [vmem:[#allocation2 + $0x1e8] sm:$0xff]
    %v223 = vld [vmem:[#allocation2 + $0x1f8] sm:$0xff]
    %v224 = vld [vmem:[#allocation2 + $0x208] sm:$0xff]
    %v225 = vld [vmem:[#allocation2 + $0x218] sm:$0xff]
    %v226 = vld [vmem:[#allocation2 + $0x228] sm:$0xff]
    %v227 = vld [vmem:[#allocation2 + $0x238] sm:$0xff]
    %v228 = vld [vmem:[#allocation2 + $0x248] sm:$0xff]
    %v229 = vld [vmem:[#allocation2 + $0x258] sm:$0xff]
    %v230 = vld [vmem:[#allocation2 + $0x268] sm:$0xff]
    %v231 = vld [vmem:[#allocation2 + $0x278] sm:$0xff]
    %v232 = vld [vmem:[#allocation2 + $0x288] sm:$0xff]
    %v233 = vld [vmem:[#allocation2 + $0x298] sm:$0xff]
    %v234 = vld [vmem:[#allocation2 + $0x2a8] sm:$0xff]
    %v235 = vld [vmem:[#allocation2 + $0x2b8] sm:$0xff]
    %v236 = vld [vmem:[#allocation2 + $0x2c8] sm:$0xff]
    %v237 = vld [vmem:[#allocation2 + $0x2d8] sm:$0xff]
    %v238 = vld [vmem:[#allocation2 + $0x2e8] sm:$0xff]
    %v239 = vld [vmem:[#allocation2 + $0x2f8] sm:$0xff]
    %v240 = vld [vmem:[#allocation2 + $0x308] sm:$0xff]
    %v241 = vld [vmem:[#allocation2 + $0x318] sm:$0xff]
    %v242 = vld [vmem:[#allocation2 + $0x328] sm:$0xff]
    %v243 = vld [vmem:[#allocation2 + $0x338] sm:$0xff]
    %v244 = vld [vmem:[#allocation2 + $0x348] sm:$0xff]
    %v245 = vld [vmem:[#allocation2 + $0x358] sm:$0xff]
    %v246 = vld [vmem:[#allocation2 + $0x368] sm:$0xff]
    %v247 = vld [vmem:[#allocation2 + $0x378] sm:$0xff]
    %v248 = vld [vmem:[#allocation2 + $0x388] sm:$0xff]
    %v249 = vld [vmem:[#allocation2 + $0x398] sm:$0xff]
    %v250 = vld [vmem:[#allocation2 + $0x3a8] sm:$0xff]
    %v251 = vld [vmem:[#allocation2 + $0x3b8] sm:$0xff]
    %v252 = vld [vmem:[#allocation2 + $0x3c8] sm:$0xff]
    %v253 = vld [vmem:[#allocation2 + $0x3d8] sm:$0xff]
    %v254 = vld [vmem:[#allocation2 + $0x3e8] sm:$0xff]
    %v255 = vld [vmem:[#allocation2 + $0x3f8] sm:$0xff]
    %v256 = vld [vmem:[#allocation2 + $0x408] sm:$0xff]
    %v257 = vld [vmem:[#allocation2 + $0x418] sm:$0xff]
    %v258 = vld [vmem:[#allocation2 + $0x428] sm:$0xff]
    %v259 = vld [vmem:[#allocation2 + $0x438] sm:$0xff]
    %v260 = vld [vmem:[#allocation2 + $0x448] sm:$0xff]
    %v261 = vld [vmem:[#allocation2 + $0x458] sm:$0xff]
    %v262 = vld [vmem:[#allocation2 + $0x468] sm:$0xff]
    %v263 = vld [vmem:[#allocation2 + $0x478] sm:$0xff]
    %v264 = vld [vmem:[#allocation2 + $0x488] sm:$0xff]
    %v265 = vld [vmem:[#allocation2 + $0x498] sm:$0xff]
    %v266 = vld [vmem:[#allocation2 + $0x4a8] sm:$0xff]
    %v267 = vld [vmem:[#allocation2 + $0x4b8] sm:$0xff]
    %v268 = vld [vmem:[#allocation2 + $0x4c8] sm:$0xff]
    %v269 = vld [vmem:[#allocation2 + $0x4d8] sm:$0xff]
    %v270 = vld [vmem:[#allocation2 + $0x4e8] sm:$0xff]
    %v271 = vld [vmem:[#allocation2 + $0x4f8] sm:$0xff]
    %v272 = vld [vmem:[#allocation2 + $0x508] sm:$0xff]
    %v273 = vld [vmem:[#allocation2 + $0x518] sm:$0xff]
    %v274 = vld [vmem:[#allocation2 + $0x528] sm:$0xff]
    %v275 = vld [vmem:[#allocation2 + $0x538] sm:$0xff]
    %v276 = vld [vmem:[#allocation2 + $0x548] sm:$0xff]
    %v277 = vld [vmem:[#allocation2 + $0x558] sm:$0xff]
    %v278 = vld [vmem:[#allocation2 + $0x568] sm:$0xff]
    %v279 = vld [vmem:[#allocation2 + $0x578] sm:$0xff]
    %v280 = vld [vmem:[#allocation2 + $0x588] sm:$0xff]
    %v281 = vld [vmem:[#allocation2 + $0x598] sm:$0xff]
    %v282 = vld [vmem:[#allocation2 + $0x5a8] sm:$0xff]
    %v283 = vld [vmem:[#allocation2 + $0x5b8] sm:$0xff]
    %v284 = vld [vmem:[#allocation2 + $0x5c8] sm:$0xff]
    %v285 = vld [vmem:[#allocation2 + $0x5d8] sm:$0xff]
    %v286 = vld [vmem:[#allocation2 + $0x5e8] sm:$0xff]
    %v287 = vld [vmem:[#allocation2 + $0x5f8] sm:$0xff]
    %v288 = vld [vmem:[#allocation2 + $0x608] sm:$0xff]
    %v289 = vld [vmem:[#allocation2 + $0x618] sm:$0xff]
    %v290 = vld [vmem:[#allocation2 + $0x628] sm:$0xff]
    %v291 = vld [vmem:[#allocation2 + $0x638] sm:$0xff]
    %v292 = vld [vmem:[#allocation2 + $0x648] sm:$0xff]
    %v293 = vld [vmem:[#allocation2 + $0x658] sm:$0xff]
    %v294 = vld [vmem:[#allocation2 + $0x668] sm:$0xff]
    %v295 = vld [vmem:[#allocation2 + $0x678] sm:$0xff]
    %v296 = vld [vmem:[#allocation2 + $0x688] sm:$0xff]
    %v297 = vld [vmem:[#allocation2 + $0x698] sm:$0xff]
    %v298 = vld [vmem:[#allocation2 + $0x6a8] sm:$0xff]
    %v299 = vld [vmem:[#allocation2 + $0x6b8] sm:$0xff]
    %v300 = vld [vmem:[#allocation2 + $0x6c8] sm:$0xff]
    %v301 = vld [vmem:[#allocation2 + $0x6d8] sm:$0xff]
    %v302 = vld [vmem:[#allocation2 + $0x6e8] sm:$0xff]
    %v303 = vld [vmem:[#allocation2 + $0x6f8] sm:$0xff]
    %v304 = vld [vmem:[%s2] sm:$0x3]
    %v305 = vld [vmem:[%s2 + $0x2] sm:$0x3]
    %v307 = vlaneseq
    %v308 = vshrl.u32 %v307, 7
    %v309 = vsub.s32 0, %v308
    %v310 = vrot.slane %v304, %v309
    %v311 = vlaneseq
    %v312 = vshrl.u32 %v311, 7
    %v313 = vsub.s32 1, %v312
    %v314 = vrot.slane %v304, %v313
    %v321 = vunpack.c.l.b16 %v76
    %v322 = vunpack.c.h.b16 %v76
    %v323 = vunpack.c.l.b16 %v77
    %v324 = vunpack.c.h.b16 %v77
    %v325 = vunpack.c.l.b16 %v78
    %v326 = vunpack.c.h.b16 %v78
    %v327 = vunpack.c.l.b16 %v79
    %v328 = vpack.c.b16 %v321, %v321
    %v329 = vpack.c.b16 %v322, %v322
    %v330 = vpack.c.b16 %v323, %v323
    %v331 = vpack.c.b16 %v324, %v324
    %v332 = vpack.c.b16 %v325, %v325
    %v333 = vpack.c.b16 %v326, %v326
    %v334 = vpack.c.b16 %v327, %v327
    %v454 = vunpack.c.l.b16 %v80
    %v455 = vunpack.c.h.b16 %v80
    %v456 = vunpack.c.l.b16 %v81
    %v457 = vunpack.c.h.b16 %v81
    %v458 = vunpack.c.l.b16 %v82
    %v459 = vunpack.c.h.b16 %v82
    %v460 = vunpack.c.l.b16 %v83
    %v461 = vunpack.c.h.b16 %v83
    %v462 = vunpack.c.l.b16 %v84
    %v463 = vunpack.c.h.b16 %v84
    %v464 = vunpack.c.l.b16 %v85
    %v465 = vunpack.c.h.b16 %v85
    %v466 = vunpack.c.l.b16 %v86
    %v467 = vunpack.c.h.b16 %v86
    %v468 = vunpack.c.l.b16 %v87
    %v469 = vunpack.c.h.b16 %v87
    %v470 = vunpack.c.l.b16 %v88
    %v471 = vunpack.c.h.b16 %v88
    %v472 = vunpack.c.l.b16 %v89
    %v473 = vunpack.c.h.b16 %v89
    %v474 = vunpack.c.l.b16 %v90
    %v475 = vunpack.c.h.b16 %v90
    %v476 = vunpack.c.l.b16 %v91
    %v477 = vunpack.c.h.b16 %v91
    %v478 = vunpack.c.l.b16 %v92
    %v479 = vunpack.c.h.b16 %v92
    %v480 = vunpack.c.l.b16 %v93
    %v481 = vunpack.c.h.b16 %v93
    %v482 = vunpack.c.l.b16 %v94
    %v483 = vunpack.c.h.b16 %v94
    %v484 = vunpack.c.l.b16 %v95
    %v485 = vunpack.c.h.b16 %v95
    %v486 = vunpack.c.l.b16 %v96
    %v487 = vunpack.c.h.b16 %v96
    %v488 = vunpack.c.l.b16 %v97
    %v489 = vunpack.c.h.b16 %v97
    %v490 = vunpack.c.l.b16 %v98
    %v491 = vunpack.c.h.b16 %v98
    %v492 = vunpack.c.l.b16 %v99
    %v493 = vunpack.c.h.b16 %v99
    %v494 = vunpack.c.l.b16 %v100
    %v495 = vunpack.c.h.b16 %v100
    %v496 = vunpack.c.l.b16 %v101
    %v497 = vunpack.c.h.b16 %v101
    %v498 = vunpack.c.l.b16 %v102
    %v499 = vunpack.c.h.b16 %v102
    %v500 = vunpack.c.l.b16 %v103
    %v501 = vunpack.c.h.b16 %v103
    %v502 = vunpack.c.l.b16 %v104
    %v503 = vunpack.c.h.b16 %v104
    %v504 = vunpack.c.l.b16 %v105
    %v505 = vunpack.c.h.b16 %v105
    %v506 = vunpack.c.l.b16 %v106
    %v507 = vunpack.c.h.b16 %v106
    %v508 = vunpack.c.l.b16 %v107
    %v509 = vunpack.c.h.b16 %v107
    %v510 = vunpack.c.l.b16 %v108
    %v511 = vunpack.c.h.b16 %v108
    %v512 = vunpack.c.l.b16 %v109
    %v513 = vunpack.c.h.b16 %v109
    %v514 = vunpack.c.l.b16 %v110
    %v515 = vunpack.c.h.b16 %v110
    %v516 = vunpack.c.l.b16 %v111
    %v517 = vunpack.c.h.b16 %v111
    %v518 = vunpack.c.l.b16 %v112
    %v519 = vunpack.c.h.b16 %v112
    %v520 = vunpack.c.l.b16 %v113
    %v521 = vunpack.c.h.b16 %v113
    %v522 = vunpack.c.l.b16 %v114
    %v523 = vunpack.c.h.b16 %v114
    %v524 = vunpack.c.l.b16 %v115
    %v525 = vunpack.c.h.b16 %v115
    %v526 = vunpack.c.l.b16 %v116
    %v527 = vunpack.c.h.b16 %v116
    %v528 = vunpack.c.l.b16 %v117
    %v529 = vunpack.c.h.b16 %v117
    %v530 = vunpack.c.l.b16 %v118
    %v531 = vunpack.c.h.b16 %v118
    %v532 = vunpack.c.l.b16 %v119
    %v533 = vunpack.c.h.b16 %v119
    %v534 = vunpack.c.l.b16 %v120
    %v535 = vunpack.c.h.b16 %v120
    %v536 = vunpack.c.l.b16 %v121
    %v537 = vunpack.c.h.b16 %v121
    %v538 = vunpack.c.l.b16 %v122
    %v539 = vunpack.c.h.b16 %v122
    %v540 = vunpack.c.l.b16 %v123
    %v541 = vunpack.c.h.b16 %v123
    %v542 = vunpack.c.l.b16 %v124
    %v543 = vunpack.c.h.b16 %v124
    %v544 = vunpack.c.l.b16 %v125
    %v545 = vunpack.c.h.b16 %v125
    %v546 = vunpack.c.l.b16 %v126
    %v547 = vunpack.c.h.b16 %v126
    %v548 = vunpack.c.l.b16 %v127
    %v549 = vunpack.c.h.b16 %v127
    %v550 = vunpack.c.l.b16 %v128
    %v551 = vunpack.c.h.b16 %v128
    %v552 = vunpack.c.l.b16 %v129
    %v553 = vunpack.c.h.b16 %v129
    %v554 = vunpack.c.l.b16 %v130
    %v555 = vunpack.c.h.b16 %v130
    %v556 = vunpack.c.l.b16 %v131
    %v557 = vunpack.c.h.b16 %v131
    %v558 = vunpack.c.l.b16 %v132
    %v559 = vunpack.c.h.b16 %v132
    %v560 = vunpack.c.l.b16 %v133
    %v561 = vunpack.c.h.b16 %v133
    %v562 = vunpack.c.l.b16 %v134
    %v563 = vunpack.c.h.b16 %v134
    %v564 = vunpack.c.l.b16 %v135
    %v565 = vunpack.c.h.b16 %v135
    %v566 = vunpack.c.l.b16 %v136
    %v567 = vunpack.c.h.b16 %v136
    %v568 = vunpack.c.l.b16 %v137
    %v569 = vunpack.c.h.b16 %v137
    %v570 = vunpack.c.l.b16 %v138
    %v571 = vunpack.c.h.b16 %v138
    %v572 = vunpack.c.l.b16 %v139
    %v573 = vunpack.c.h.b16 %v139
    %v574 = vunpack.c.l.b16 %v140
    %v575 = vunpack.c.h.b16 %v140
    %v576 = vunpack.c.l.b16 %v141
    %v577 = vunpack.c.h.b16 %v141
    %v578 = vunpack.c.l.b16 %v142
    %v579 = vunpack.c.h.b16 %v142
    %v580 = vunpack.c.l.b16 %v143
    %v581 = vunpack.c.h.b16 %v143
    %v582 = vunpack.c.l.b16 %v144
    %v583 = vunpack.c.h.b16 %v144
    %v584 = vunpack.c.l.b16 %v145
    %v585 = vunpack.c.h.b16 %v145
    %v586 = vunpack.c.l.b16 %v146
    %v587 = vunpack.c.h.b16 %v146
    %v588 = vunpack.c.l.b16 %v147
    %v589 = vunpack.c.h.b16 %v147
    %v590 = vunpack.c.l.b16 %v148
    %v591 = vunpack.c.h.b16 %v148
    %v592 = vunpack.c.l.b16 %v149
    %v593 = vunpack.c.h.b16 %v149
    %v594 = vunpack.c.l.b16 %v150
    %v595 = vunpack.c.h.b16 %v150
    %v596 = vunpack.c.l.b16 %v151
    %v597 = vunpack.c.h.b16 %v151
    %v598 = vunpack.c.l.b16 %v152
    %v599 = vunpack.c.h.b16 %v152
    %v600 = vunpack.c.l.b16 %v153
    %v601 = vunpack.c.h.b16 %v153
    %v602 = vunpack.c.l.b16 %v154
    %v603 = vunpack.c.h.b16 %v154
    %v604 = vunpack.c.l.b16 %v155
    %v605 = vunpack.c.h.b16 %v155
    %v606 = vunpack.c.l.b16 %v156
    %v607 = vunpack.c.h.b16 %v156
    %v608 = vunpack.c.l.b16 %v157
    %v609 = vunpack.c.h.b16 %v157
    %v610 = vunpack.c.l.b16 %v158
    %v611 = vunpack.c.h.b16 %v158
    %v612 = vunpack.c.l.b16 %v159
    %v613 = vunpack.c.h.b16 %v159
    %v614 = vunpack.c.l.b16 %v160
    %v615 = vunpack.c.h.b16 %v160
    %v616 = vunpack.c.l.b16 %v161
    %v617 = vunpack.c.h.b16 %v161
    %v618 = vunpack.c.l.b16 %v162
    %v619 = vunpack.c.h.b16 %v162
    %v620 = vunpack.c.l.b16 %v163
    %v621 = vunpack.c.h.b16 %v163
    %v622 = vunpack.c.l.b16 %v164
    %v623 = vunpack.c.h.b16 %v164
    %v624 = vunpack.c.l.b16 %v165
    %v625 = vunpack.c.h.b16 %v165
    %v626 = vunpack.c.l.b16 %v166
    %v627 = vunpack.c.h.b16 %v166
    %v628 = vunpack.c.l.b16 %v167
    %v629 = vunpack.c.h.b16 %v167
    %v630 = vunpack.c.l.b16 %v168
    %v631 = vunpack.c.h.b16 %v168
    %v632 = vunpack.c.l.b16 %v169
    %v633 = vunpack.c.h.b16 %v169
    %v634 = vunpack.c.l.b16 %v170
    %v635 = vunpack.c.h.b16 %v170
    %v636 = vunpack.c.l.b16 %v171
    %v637 = vunpack.c.h.b16 %v171
    %v638 = vunpack.c.l.b16 %v172
    %v639 = vunpack.c.h.b16 %v172
    %v640 = vunpack.c.l.b16 %v173
    %v641 = vunpack.c.h.b16 %v173
    %v642 = vunpack.c.l.b16 %v174
    %v643 = vunpack.c.h.b16 %v174
    %v644 = vunpack.c.l.b16 %v175
    %v645 = vunpack.c.h.b16 %v175
    %v646 = vunpack.c.l.b16 %v176
    %v647 = vunpack.c.h.b16 %v176
    %v648 = vunpack.c.l.b16 %v177
    %v649 = vunpack.c.h.b16 %v177
    %v650 = vunpack.c.l.b16 %v178
    %v651 = vunpack.c.h.b16 %v178
    %v652 = vunpack.c.l.b16 %v179
    %v653 = vunpack.c.h.b16 %v179
    %v654 = vunpack.c.l.b16 %v180
    %v655 = vunpack.c.h.b16 %v180
    %v656 = vunpack.c.l.b16 %v181
    %v657 = vunpack.c.h.b16 %v181
    %v658 = vunpack.c.l.b16 %v182
    %v659 = vunpack.c.h.b16 %v182
    %v660 = vunpack.c.l.b16 %v183
    %v661 = vunpack.c.h.b16 %v183
    %v662 = vunpack.c.l.b16 %v184
    %v663 = vunpack.c.h.b16 %v184
    %v664 = vunpack.c.l.b16 %v185
    %v665 = vunpack.c.h.b16 %v185
    %v666 = vunpack.c.l.b16 %v186
    %v667 = vunpack.c.h.b16 %v186
    %v668 = vunpack.c.l.b16 %v187
    %v669 = vunpack.c.h.b16 %v187
    %v670 = vunpack.c.l.b16 %v188
    %v671 = vunpack.c.h.b16 %v188
    %v672 = vunpack.c.l.b16 %v189
    %v673 = vunpack.c.h.b16 %v189
    %v674 = vunpack.c.l.b16 %v190
    %v675 = vunpack.c.h.b16 %v190
    %v676 = vunpack.c.l.b16 %v191
    %v677 = vunpack.c.h.b16 %v191
    %v678 = vpack.c.b16 %v456, %v454
    %v679 = vpack.c.b16 %v457, %v455
    %v680 = vpack.c.b16 %v460, %v458
    %v681 = vpack.c.b16 %v461, %v459
    %v682 = vpack.c.b16 %v464, %v462
    %v683 = vpack.c.b16 %v465, %v463
    %v684 = vpack.c.b16 %v468, %v466
    %v685 = vpack.c.b16 %v469, %v467
    %v686 = vpack.c.b16 %v472, %v470
    %v687 = vpack.c.b16 %v473, %v471
    %v688 = vpack.c.b16 %v476, %v474
    %v689 = vpack.c.b16 %v477, %v475
    %v690 = vpack.c.b16 %v480, %v478
    %v691 = vpack.c.b16 %v481, %v479
    %v692 = vpack.c.b16 %v484, %v482
    %v693 = vpack.c.b16 %v485, %v483
    %v694 = vpack.c.b16 %v488, %v486
    %v695 = vpack.c.b16 %v489, %v487
    %v696 = vpack.c.b16 %v492, %v490
    %v697 = vpack.c.b16 %v493, %v491
    %v698 = vpack.c.b16 %v496, %v494
    %v699 = vpack.c.b16 %v497, %v495
    %v700 = vpack.c.b16 %v500, %v498
    %v701 = vpack.c.b16 %v501, %v499
    %v702 = vpack.c.b16 %v504, %v502
    %v703 = vpack.c.b16 %v505, %v503
    %v704 = vpack.c.b16 %v508, %v506
    %v705 = vpack.c.b16 %v509, %v507
    %v706 = vpack.c.b16 %v512, %v510
    %v707 = vpack.c.b16 %v513, %v511
    %v708 = vpack.c.b16 %v516, %v514
    %v709 = vpack.c.b16 %v517, %v515
    %v710 = vpack.c.b16 %v520, %v518
    %v711 = vpack.c.b16 %v521, %v519
    %v712 = vpack.c.b16 %v524, %v522
    %v713 = vpack.c.b16 %v525, %v523
    %v714 = vpack.c.b16 %v528, %v526
    %v715 = vpack.c.b16 %v529, %v527
    %v716 = vpack.c.b16 %v532, %v530
    %v717 = vpack.c.b16 %v533, %v531
    %v718 = vpack.c.b16 %v536, %v534
    %v719 = vpack.c.b16 %v537, %v535
    %v720 = vpack.c.b16 %v540, %v538
    %v721 = vpack.c.b16 %v541, %v539
    %v722 = vpack.c.b16 %v544, %v542
    %v723 = vpack.c.b16 %v545, %v543
    %v724 = vpack.c.b16 %v548, %v546
    %v725 = vpack.c.b16 %v549, %v547
    %v726 = vpack.c.b16 %v552, %v550
    %v727 = vpack.c.b16 %v553, %v551
    %v728 = vpack.c.b16 %v556, %v554
    %v729 = vpack.c.b16 %v557, %v555
    %v730 = vpack.c.b16 %v560, %v558
    %v731 = vpack.c.b16 %v561, %v559
    %v732 = vpack.c.b16 %v564, %v562
    %v733 = vpack.c.b16 %v565, %v563
    %v734 = vpack.c.b16 %v568, %v566
    %v735 = vpack.c.b16 %v569, %v567
    %v736 = vpack.c.b16 %v572, %v570
    %v737 = vpack.c.b16 %v573, %v571
    %v738 = vpack.c.b16 %v576, %v574
    %v739 = vpack.c.b16 %v577, %v575
    %v740 = vpack.c.b16 %v580, %v578
    %v741 = vpack.c.b16 %v581, %v579
    %v742 = vpack.c.b16 %v584, %v582
    %v743 = vpack.c.b16 %v585, %v583
    %v744 = vpack.c.b16 %v588, %v586
    %v745 = vpack.c.b16 %v589, %v587
    %v746 = vpack.c.b16 %v592, %v590
    %v747 = vpack.c.b16 %v593, %v591
    %v748 = vpack.c.b16 %v596, %v594
    %v749 = vpack.c.b16 %v597, %v595
    %v750 = vpack.c.b16 %v600, %v598
    %v751 = vpack.c.b16 %v601, %v599
    %v752 = vpack.c.b16 %v604, %v602
    %v753 = vpack.c.b16 %v605, %v603
    %v754 = vpack.c.b16 %v608, %v606
    %v755 = vpack.c.b16 %v609, %v607
    %v756 = vpack.c.b16 %v612, %v610
    %v757 = vpack.c.b16 %v613, %v611
    %v758 = vpack.c.b16 %v616, %v614
    %v759 = vpack.c.b16 %v617, %v615
    %v760 = vpack.c.b16 %v620, %v618
    %v761 = vpack.c.b16 %v621, %v619
    %v762 = vpack.c.b16 %v624, %v622
    %v763 = vpack.c.b16 %v625, %v623
    %v764 = vpack.c.b16 %v628, %v626
    %v765 = vpack.c.b16 %v629, %v627
    %v766 = vpack.c.b16 %v632, %v630
    %v767 = vpack.c.b16 %v633, %v631
    %v768 = vpack.c.b16 %v636, %v634
    %v769 = vpack.c.b16 %v637, %v635
    %v770 = vpack.c.b16 %v640, %v638
    %v771 = vpack.c.b16 %v641, %v639
    %v772 = vpack.c.b16 %v644, %v642
    %v773 = vpack.c.b16 %v645, %v643
    %v774 = vpack.c.b16 %v648, %v646
    %v775 = vpack.c.b16 %v649, %v647
    %v776 = vpack.c.b16 %v652, %v650
    %v777 = vpack.c.b16 %v653, %v651
    %v778 = vpack.c.b16 %v656, %v654
    %v779 = vpack.c.b16 %v657, %v655
    %v780 = vpack.c.b16 %v660, %v658
    %v781 = vpack.c.b16 %v661, %v659
    %v782 = vpack.c.b16 %v664, %v662
    %v783 = vpack.c.b16 %v665, %v663
    %v784 = vpack.c.b16 %v668, %v666
    %v785 = vpack.c.b16 %v669, %v667
    %v786 = vpack.c.b16 %v672, %v670
    %v787 = vpack.c.b16 %v673, %v671
    %v788 = vpack.c.b16 %v676, %v674
    %v789 = vpack.c.b16 %v677, %v675
    %902 = vmatprep.subr.bf16.mxu0 %v693
    %903 = vmatpush1.bf16.msra.mxu0 %v692
    %904 = vmatprep.subr.bf16.mxu0 %v691
    %905 = vmatpush1.bf16.msra.mxu0 %v690
    %906 = vmatprep.subr.bf16.mxu0 %v689
    %907 = vmatpush1.bf16.msra.mxu0 %v688
    %908 = vmatprep.subr.bf16.mxu0 %v687
    %909 = vmatpush1.bf16.msra.mxu0 %v686
    %910 = vmatprep.subr.bf16.mxu0 %v685
    %911 = vmatpush1.bf16.msra.mxu0 %v684
    %912 = vmatprep.subr.bf16.mxu0 %v683
    %913 = vmatpush1.bf16.msra.mxu0 %v682
    %914 = vmatprep.subr.bf16.mxu0 %v681
    %915 = vmatpush1.bf16.msra.mxu0 %v680
    %916 = vmatprep.subr.bf16.mxu0 %v679
    %917 = vmatpush1.bf16.msra.mxu0 %v678
    %918 = vmatprep.subr.bf16.mxu0 %v709
    %919 = vmatpush2.bf16.msra.mxu0 %v708
    %920 = vmatprep.subr.bf16.mxu0 %v707
    %921 = vmatpush2.bf16.msra.mxu0 %v706
    %922 = vmatprep.subr.bf16.mxu0 %v705
    %923 = vmatpush2.bf16.msra.mxu0 %v704
    %924 = vmatprep.subr.bf16.mxu0 %v703
    %925 = vmatpush2.bf16.msra.mxu0 %v702
    %926 = vmatprep.subr.bf16.mxu0 %v701
    %927 = vmatpush2.bf16.msra.mxu0 %v700
    %928 = vmatprep.subr.bf16.mxu0 %v699
    %929 = vmatpush2.bf16.msra.mxu0 %v698
    %930 = vmatprep.subr.bf16.mxu0 %v697
    %931 = vmatpush2.bf16.msra.mxu0 %v696
    %932 = vmatprep.subr.bf16.mxu0 %v695
    %933 = vmatpush2.bf16.msra.mxu0 %v694
    %934 = vmatprep.mubr.bf16.mxu0 %v329
    %935 = vmatmul.mubr.bf16.gmra.mxu0 %v328
    %v936 = vpop.f32.mrf.mxu0
    %v937 = vadd.f32 %v310, %v936
    %v938 = vpop.f32.mrf.mxu0
    %v939 = vadd.f32 %v314, %v938
    %v940 = vpop.f32.mrf.mxu0
    %v941 = vpop.f32.mrf.mxu0
    %942 = vdwg.mxu0
    %943 = vmatprep.subr.bf16.mxu0 %v725
    %944 = vmatpush1.bf16.msra.mxu0 %v724
    %945 = vmatprep.subr.bf16.mxu0 %v723
    %946 = vmatpush1.bf16.msra.mxu0 %v722
    %947 = vmatprep.subr.bf16.mxu0 %v721
    %948 = vmatpush1.bf16.msra.mxu0 %v720
    %949 = vmatprep.subr.bf16.mxu0 %v719
    %950 = vmatpush1.bf16.msra.mxu0 %v718
    %951 = vmatprep.subr.bf16.mxu0 %v717
    %952 = vmatpush1.bf16.msra.mxu0 %v716
    %953 = vmatprep.subr.bf16.mxu0 %v715
    %954 = vmatpush1.bf16.msra.mxu0 %v714
    %955 = vmatprep.subr.bf16.mxu0 %v713
    %956 = vmatpush1.bf16.msra.mxu0 %v712
    %957 = vmatprep.subr.bf16.mxu0 %v711
    %958 = vmatpush1.bf16.msra.mxu0 %v710
    %959 = vmatprep.subr.bf16.mxu0 %v741
    %960 = vmatpush2.bf16.msra.mxu0 %v740
    %961 = vmatprep.subr.bf16.mxu0 %v739
    %962 = vmatpush2.bf16.msra.mxu0 %v738
    %963 = vmatprep.subr.bf16.mxu0 %v737
    %964 = vmatpush2.bf16.msra.mxu0 %v736
    %965 = vmatprep.subr.bf16.mxu0 %v735
    %966 = vmatpush2.bf16.msra.mxu0 %v734
    %967 = vmatprep.subr.bf16.mxu0 %v733
    %968 = vmatpush2.bf16.msra.mxu0 %v732
    %969 = vmatprep.subr.bf16.mxu0 %v731
    %970 = vmatpush2.bf16.msra.mxu0 %v730
    %971 = vmatprep.subr.bf16.mxu0 %v729
    %972 = vmatpush2.bf16.msra.mxu0 %v728
    %973 = vmatprep.subr.bf16.mxu0 %v727
    %974 = vmatpush2.bf16.msra.mxu0 %v726
    %975 = vmatprep.mubr.bf16.mxu0 %v331
    %976 = vmatmul.mubr.bf16.gmra.mxu0 %v330
    %v977 = vpop.f32.mrf.mxu0
    %v978 = vadd.f32 %v937, %v977
    %v979 = vpop.f32.mrf.mxu0
    %v980 = vadd.f32 %v939, %v979
    %v981 = vpop.f32.mrf.mxu0
    %v982 = vpop.f32.mrf.mxu0
    %983 = vdwg.mxu0
    %984 = vmatprep.subr.bf16.mxu0 %v757
    %985 = vmatpush1.bf16.msra.mxu0 %v756
    %986 = vmatprep.subr.bf16.mxu0 %v755
    %987 = vmatpush1.bf16.msra.mxu0 %v754
    %988 = vmatprep.subr.bf16.mxu0 %v753
    %989 = vmatpush1.bf16.msra.mxu0 %v752
    %990 = vmatprep.subr.bf16.mxu0 %v751
    %991 = vmatpush1.bf16.msra.mxu0 %v750
    %992 = vmatprep.subr.bf16.mxu0 %v749
    %993 = vmatpush1.bf16.msra.mxu0 %v748
    %994 = vmatprep.subr.bf16.mxu0 %v747
    %995 = vmatpush1.bf16.msra.mxu0 %v746
    %996 = vmatprep.subr.bf16.mxu0 %v745
    %997 = vmatpush1.bf16.msra.mxu0 %v744
    %998 = vmatprep.subr.bf16.mxu0 %v743
    %999 = vmatpush1.bf16.msra.mxu0 %v742
    %1000 = vmatprep.subr.bf16.mxu0 %v773
    %1001 = vmatpush2.bf16.msra.mxu0 %v772
    %1002 = vmatprep.subr.bf16.mxu0 %v771
    %1003 = vmatpush2.bf16.msra.mxu0 %v770
    %1004 = vmatprep.subr.bf16.mxu0 %v769
    %1005 = vmatpush2.bf16.msra.mxu0 %v768
    %1006 = vmatprep.subr.bf16.mxu0 %v767
    %1007 = vmatpush2.bf16.msra.mxu0 %v766
    %1008 = vmatprep.subr.bf16.mxu0 %v765
    %1009 = vmatpush2.bf16.msra.mxu0 %v764
    %1010 = vmatprep.subr.bf16.mxu0 %v763
    %1011 = vmatpush2.bf16.msra.mxu0 %v762
    %1012 = vmatprep.subr.bf16.mxu0 %v761
    %1013 = vmatpush2.bf16.msra.mxu0 %v760
    %1014 = vmatprep.subr.bf16.mxu0 %v759
    %1015 = vmatpush2.bf16.msra.mxu0 %v758
    %1016 = vmatprep.mubr.bf16.mxu0 %v333
    %1017 = vmatmul.mubr.bf16.gmra.mxu0 %v332
    %v1018 = vpop.f32.mrf.mxu0
    %v1019 = vadd.f32 %v978, %v1018
    %v1020 = vpop.f32.mrf.mxu0
    %v1021 = vadd.f32 %v980, %v1020
    %v1022 = vpop.f32.mrf.mxu0
    %v1023 = vpop.f32.mrf.mxu0
    %1024 = vdwg.mxu0
    %1025 = vmatprep.subr.bf16.mxu0 %v789
    %1026 = vmatpush1.bf16.msra.mxu0 %v788
    %1027 = vmatprep.subr.bf16.mxu0 %v787
    %1028 = vmatpush1.bf16.msra.mxu0 %v786
    %1029 = vmatprep.subr.bf16.mxu0 %v785
    %1030 = vmatpush1.bf16.msra.mxu0 %v784
    %1031 = vmatprep.subr.bf16.mxu0 %v783
    %1032 = vmatpush1.bf16.msra.mxu0 %v782
    %1033 = vmatprep.subr.bf16.mxu0 %v781
    %1034 = vmatpush1.bf16.msra.mxu0 %v780
    %1035 = vmatprep.subr.bf16.mxu0 %v779
    %1036 = vmatpush1.bf16.msra.mxu0 %v778
    %1037 = vmatprep.subr.bf16.mxu0 %v777
    %1038 = vmatpush1.bf16.msra.mxu0 %v776
    %1039 = vmatprep.subr.bf16.mxu0 %v775
    %1040 = vmatpush1.bf16.msra.mxu0 %v774
    %1041 = vmatprep.subr.bf16.mxu0 0
    %1042 = vmatpush2.bf16.msra.mxu0 0
    %1043 = vmatprep.subr.bf16.mxu0 0
    %1044 = vmatpush2.bf16.msra.mxu0 0
    %1045 = vmatprep.subr.bf16.mxu0 0
    %1046 = vmatpush2.bf16.msra.mxu0 0
    %1047 = vmatprep.subr.bf16.mxu0 0
    %1048 = vmatpush2.bf16.msra.mxu0 0
    %1049 = vmatprep.subr.bf16.mxu0 0
    %1050 = vmatpush2.bf16.msra.mxu0 0
    %1051 = vmatprep.subr.bf16.mxu0 0
    %1052 = vmatpush2.bf16.msra.mxu0 0
    %1053 = vmatprep.subr.bf16.mxu0 0
    %1054 = vmatpush2.bf16.msra.mxu0 0
    %1055 = vmatprep.subr.bf16.mxu0 0
    %1056 = vmatpush2.bf16.msra.mxu0 0
    %1057 = vmatprep.mubr.bf16.mxu0 0
    %1058 = vmatmul.mubr.bf16.gmra.mxu0 %v334
    %v1059 = vpop.f32.mrf.mxu0
    %v1060 = vadd.f32 %v1019, %v1059
    %v1061 = vpop.f32.mrf.mxu0
    %v1062 = vadd.f32 %v1021, %v1061
    %v1063 = vpop.f32.mrf.mxu0
    %v1064 = vpop.f32.mrf.mxu0
    %1065 = vdwg.mxu0
    %v1066 = vmul.bf16 %v76, %v76
    %v1067 = vmul.bf16 %v77, %v77
    %v1068 = vmul.bf16 %v78, %v78
    %v1069 = vmul.bf16 %v79, %v79
    %v1071 = vlaneseq
    %v1072 = vshrl.u32 %v1071, 7
    %v1073 = vsub.s32 0, %v1072
    %v1074 = vrot.slane %v305, %v1073
    %v1075 = vlaneseq
    %v1076 = vshrl.u32 %v1075, 7
    %v1077 = vsub.s32 1, %v1076
    %v1078 = vrot.slane %v305, %v1077
    %v1085 = vunpack.c.l.b16 %v1066
    %v1086 = vunpack.c.h.b16 %v1066
    %v1087 = vunpack.c.l.b16 %v1067
    %v1088 = vunpack.c.h.b16 %v1067
    %v1089 = vunpack.c.l.b16 %v1068
    %v1090 = vunpack.c.h.b16 %v1068
    %v1091 = vunpack.c.l.b16 %v1069
    %v1092 = vpack.c.b16 %v1085, %v1085
    %v1093 = vpack.c.b16 %v1086, %v1086
    %v1094 = vpack.c.b16 %v1087, %v1087
    %v1095 = vpack.c.b16 %v1088, %v1088
    %v1096 = vpack.c.b16 %v1089, %v1089
    %v1097 = vpack.c.b16 %v1090, %v1090
    %v1098 = vpack.c.b16 %v1091, %v1091
    %v1218 = vunpack.c.l.b16 %v192
    %v1219 = vunpack.c.h.b16 %v192
    %v1220 = vunpack.c.l.b16 %v193
    %v1221 = vunpack.c.h.b16 %v193
    %v1222 = vunpack.c.l.b16 %v194
    %v1223 = vunpack.c.h.b16 %v194
    %v1224 = vunpack.c.l.b16 %v195
    %v1225 = vunpack.c.h.b16 %v195
    %v1226 = vunpack.c.l.b16 %v196
    %v1227 = vunpack.c.h.b16 %v196
    %v1228 = vunpack.c.l.b16 %v197
    %v1229 = vunpack.c.h.b16 %v197
    %v1230 = vunpack.c.l.b16 %v198
    %v1231 = vunpack.c.h.b16 %v198
    %v1232 = vunpack.c.l.b16 %v199
    %v1233 = vunpack.c.h.b16 %v199
    %v1234 = vunpack.c.l.b16 %v200
    %v1235 = vunpack.c.h.b16 %v200
    %v1236 = vunpack.c.l.b16 %v201
    %v1237 = vunpack.c.h.b16 %v201
    %v1238 = vunpack.c.l.b16 %v202
    %v1239 = vunpack.c.h.b16 %v202
    %v1240 = vunpack.c.l.b16 %v203
    %v1241 = vunpack.c.h.b16 %v203
    %v1242 = vunpack.c.l.b16 %v204
    %v1243 = vunpack.c.h.b16 %v204
    %v1244 = vunpack.c.l.b16 %v205
    %v1245 = vunpack.c.h.b16 %v205
    %v1246 = vunpack.c.l.b16 %v206
    %v1247 = vunpack.c.h.b16 %v206
    %v1248 = vunpack.c.l.b16 %v207
    %v1249 = vunpack.c.h.b16 %v207
    %v1250 = vunpack.c.l.b16 %v208
    %v1251 = vunpack.c.h.b16 %v208
    %v1252 = vunpack.c.l.b16 %v209
    %v1253 = vunpack.c.h.b16 %v209
    %v1254 = vunpack.c.l.b16 %v210
    %v1255 = vunpack.c.h.b16 %v210
    %v1256 = vunpack.c.l.b16 %v211
    %v1257 = vunpack.c.h.b16 %v211
    %v1258 = vunpack.c.l.b16 %v212
    %v1259 = vunpack.c.h.b16 %v212
    %v1260 = vunpack.c.l.b16 %v213
    %v1261 = vunpack.c.h.b16 %v213
    %v1262 = vunpack.c.l.b16 %v214
    %v1263 = vunpack.c.h.b16 %v214
    %v1264 = vunpack.c.l.b16 %v215
    %v1265 = vunpack.c.h.b16 %v215
    %v1266 = vunpack.c.l.b16 %v216
    %v1267 = vunpack.c.h.b16 %v216
    %v1268 = vunpack.c.l.b16 %v217
    %v1269 = vunpack.c.h.b16 %v217
    %v1270 = vunpack.c.l.b16 %v218
    %v1271 = vunpack.c.h.b16 %v218
    %v1272 = vunpack.c.l.b16 %v219
    %v1273 = vunpack.c.h.b16 %v219
    %v1274 = vunpack.c.l.b16 %v220
    %v1275 = vunpack.c.h.b16 %v220
    %v1276 = vunpack.c.l.b16 %v221
    %v1277 = vunpack.c.h.b16 %v221
    %v1278 = vunpack.c.l.b16 %v222
    %v1279 = vunpack.c.h.b16 %v222
    %v1280 = vunpack.c.l.b16 %v223
    %v1281 = vunpack.c.h.b16 %v223
    %v1282 = vunpack.c.l.b16 %v224
    %v1283 = vunpack.c.h.b16 %v224
    %v1284 = vunpack.c.l.b16 %v225
    %v1285 = vunpack.c.h.b16 %v225
    %v1286 = vunpack.c.l.b16 %v226
    %v1287 = vunpack.c.h.b16 %v226
    %v1288 = vunpack.c.l.b16 %v227
    %v1289 = vunpack.c.h.b16 %v227
    %v1290 = vunpack.c.l.b16 %v228
    %v1291 = vunpack.c.h.b16 %v228
    %v1292 = vunpack.c.l.b16 %v229
    %v1293 = vunpack.c.h.b16 %v229
    %v1294 = vunpack.c.l.b16 %v230
    %v1295 = vunpack.c.h.b16 %v230
    %v1296 = vunpack.c.l.b16 %v231
    %v1297 = vunpack.c.h.b16 %v231
    %v1298 = vunpack.c.l.b16 %v232
    %v1299 = vunpack.c.h.b16 %v232
    %v1300 = vunpack.c.l.b16 %v233
    %v1301 = vunpack.c.h.b16 %v233
    %v1302 = vunpack.c.l.b16 %v234
    %v1303 = vunpack.c.h.b16 %v234
    %v1304 = vunpack.c.l.b16 %v235
    %v1305 = vunpack.c.h.b16 %v235
    %v1306 = vunpack.c.l.b16 %v236
    %v1307 = vunpack.c.h.b16 %v236
    %v1308 = vunpack.c.l.b16 %v237
    %v1309 = vunpack.c.h.b16 %v237
    %v1310 = vunpack.c.l.b16 %v238
    %v1311 = vunpack.c.h.b16 %v238
    %v1312 = vunpack.c.l.b16 %v239
    %v1313 = vunpack.c.h.b16 %v239
    %v1314 = vunpack.c.l.b16 %v240
    %v1315 = vunpack.c.h.b16 %v240
    %v1316 = vunpack.c.l.b16 %v241
    %v1317 = vunpack.c.h.b16 %v241
    %v1318 = vunpack.c.l.b16 %v242
    %v1319 = vunpack.c.h.b16 %v242
    %v1320 = vunpack.c.l.b16 %v243
    %v1321 = vunpack.c.h.b16 %v243
    %v1322 = vunpack.c.l.b16 %v244
    %v1323 = vunpack.c.h.b16 %v244
    %v1324 = vunpack.c.l.b16 %v245
    %v1325 = vunpack.c.h.b16 %v245
    %v1326 = vunpack.c.l.b16 %v246
    %v1327 = vunpack.c.h.b16 %v246
    %v1328 = vunpack.c.l.b16 %v247
    %v1329 = vunpack.c.h.b16 %v247
    %v1330 = vunpack.c.l.b16 %v248
    %v1331 = vunpack.c.h.b16 %v248
    %v1332 = vunpack.c.l.b16 %v249
    %v1333 = vunpack.c.h.b16 %v249
    %v1334 = vunpack.c.l.b16 %v250
    %v1335 = vunpack.c.h.b16 %v250
    %v1336 = vunpack.c.l.b16 %v251
    %v1337 = vunpack.c.h.b16 %v251
    %v1338 = vunpack.c.l.b16 %v252
    %v1339 = vunpack.c.h.b16 %v252
    %v1340 = vunpack.c.l.b16 %v253
    %v1341 = vunpack.c.h.b16 %v253
    %v1342 = vunpack.c.l.b16 %v254
    %v1343 = vunpack.c.h.b16 %v254
    %v1344 = vunpack.c.l.b16 %v255
    %v1345 = vunpack.c.h.b16 %v255
    %v1346 = vunpack.c.l.b16 %v256
    %v1347 = vunpack.c.h.b16 %v256
    %v1348 = vunpack.c.l.b16 %v257
    %v1349 = vunpack.c.h.b16 %v257
    %v1350 = vunpack.c.l.b16 %v258
    %v1351 = vunpack.c.h.b16 %v258
    %v1352 = vunpack.c.l.b16 %v259
    %v1353 = vunpack.c.h.b16 %v259
    %v1354 = vunpack.c.l.b16 %v260
    %v1355 = vunpack.c.h.b16 %v260
    %v1356 = vunpack.c.l.b16 %v261
    %v1357 = vunpack.c.h.b16 %v261
    %v1358 = vunpack.c.l.b16 %v262
    %v1359 = vunpack.c.h.b16 %v262
    %v1360 = vunpack.c.l.b16 %v263
    %v1361 = vunpack.c.h.b16 %v263
    %v1362 = vunpack.c.l.b16 %v264
    %v1363 = vunpack.c.h.b16 %v264
    %v1364 = vunpack.c.l.b16 %v265
    %v1365 = vunpack.c.h.b16 %v265
    %v1366 = vunpack.c.l.b16 %v266
    %v1367 = vunpack.c.h.b16 %v266
    %v1368 = vunpack.c.l.b16 %v267
    %v1369 = vunpack.c.h.b16 %v267
    %v1370 = vunpack.c.l.b16 %v268
    %v1371 = vunpack.c.h.b16 %v268
    %v1372 = vunpack.c.l.b16 %v269
    %v1373 = vunpack.c.h.b16 %v269
    %v1374 = vunpack.c.l.b16 %v270
    %v1375 = vunpack.c.h.b16 %v270
    %v1376 = vunpack.c.l.b16 %v271
    %v1377 = vunpack.c.h.b16 %v271
    %v1378 = vunpack.c.l.b16 %v272
    %v1379 = vunpack.c.h.b16 %v272
    %v1380 = vunpack.c.l.b16 %v273
    %v1381 = vunpack.c.h.b16 %v273
    %v1382 = vunpack.c.l.b16 %v274
    %v1383 = vunpack.c.h.b16 %v274
    %v1384 = vunpack.c.l.b16 %v275
    %v1385 = vunpack.c.h.b16 %v275
    %v1386 = vunpack.c.l.b16 %v276
    %v1387 = vunpack.c.h.b16 %v276
    %v1388 = vunpack.c.l.b16 %v277
    %v1389 = vunpack.c.h.b16 %v277
    %v1390 = vunpack.c.l.b16 %v278
    %v1391 = vunpack.c.h.b16 %v278
    %v1392 = vunpack.c.l.b16 %v279
    %v1393 = vunpack.c.h.b16 %v279
    %v1394 = vunpack.c.l.b16 %v280
    %v1395 = vunpack.c.h.b16 %v280
    %v1396 = vunpack.c.l.b16 %v281
    %v1397 = vunpack.c.h.b16 %v281
    %v1398 = vunpack.c.l.b16 %v282
    %v1399 = vunpack.c.h.b16 %v282
    %v1400 = vunpack.c.l.b16 %v283
    %v1401 = vunpack.c.h.b16 %v283
    %v1402 = vunpack.c.l.b16 %v284
    %v1403 = vunpack.c.h.b16 %v284
    %v1404 = vunpack.c.l.b16 %v285
    %v1405 = vunpack.c.h.b16 %v285
    %v1406 = vunpack.c.l.b16 %v286
    %v1407 = vunpack.c.h.b16 %v286
    %v1408 = vunpack.c.l.b16 %v287
    %v1409 = vunpack.c.h.b16 %v287
    %v1410 = vunpack.c.l.b16 %v288
    %v1411 = vunpack.c.h.b16 %v288
    %v1412 = vunpack.c.l.b16 %v289
    %v1413 = vunpack.c.h.b16 %v289
    %v1414 = vunpack.c.l.b16 %v290
    %v1415 = vunpack.c.h.b16 %v290
    %v1416 = vunpack.c.l.b16 %v291
    %v1417 = vunpack.c.h.b16 %v291
    %v1418 = vunpack.c.l.b16 %v292
    %v1419 = vunpack.c.h.b16 %v292
    %v1420 = vunpack.c.l.b16 %v293
    %v1421 = vunpack.c.h.b16 %v293
    %v1422 = vunpack.c.l.b16 %v294
    %v1423 = vunpack.c.h.b16 %v294
    %v1424 = vunpack.c.l.b16 %v295
    %v1425 = vunpack.c.h.b16 %v295
    %v1426 = vunpack.c.l.b16 %v296
    %v1427 = vunpack.c.h.b16 %v296
    %v1428 = vunpack.c.l.b16 %v297
    %v1429 = vunpack.c.h.b16 %v297
    %v1430 = vunpack.c.l.b16 %v298
    %v1431 = vunpack.c.h.b16 %v298
    %v1432 = vunpack.c.l.b16 %v299
    %v1433 = vunpack.c.h.b16 %v299
    %v1434 = vunpack.c.l.b16 %v300
    %v1435 = vunpack.c.h.b16 %v300
    %v1436 = vunpack.c.l.b16 %v301
    %v1437 = vunpack.c.h.b16 %v301
    %v1438 = vunpack.c.l.b16 %v302
    %v1439 = vunpack.c.h.b16 %v302
    %v1440 = vunpack.c.l.b16 %v303
    %v1441 = vunpack.c.h.b16 %v303
    %v1442 = vpack.c.b16 %v1220, %v1218
    %v1443 = vpack.c.b16 %v1221, %v1219
    %v1444 = vpack.c.b16 %v1224, %v1222
    %v1445 = vpack.c.b16 %v1225, %v1223
    %v1446 = vpack.c.b16 %v1228, %v1226
    %v1447 = vpack.c.b16 %v1229, %v1227
    %v1448 = vpack.c.b16 %v1232, %v1230
    %v1449 = vpack.c.b16 %v1233, %v1231
    %v1450 = vpack.c.b16 %v1236, %v1234
    %v1451 = vpack.c.b16 %v1237, %v1235
    %v1452 = vpack.c.b16 %v1240, %v1238
    %v1453 = vpack.c.b16 %v1241, %v1239
    %v1454 = vpack.c.b16 %v1244, %v1242
    %v1455 = vpack.c.b16 %v1245, %v1243
    %v1456 = vpack.c.b16 %v1248, %v1246
    %v1457 = vpack.c.b16 %v1249, %v1247
    %v1458 = vpack.c.b16 %v1252, %v1250
    %v1459 = vpack.c.b16 %v1253, %v1251
    %v1460 = vpack.c.b16 %v1256, %v1254
    %v1461 = vpack.c.b16 %v1257, %v1255
    %v1462 = vpack.c.b16 %v1260, %v1258
    %v1463 = vpack.c.b16 %v1261, %v1259
    %v1464 = vpack.c.b16 %v1264, %v1262
    %v1465 = vpack.c.b16 %v1265, %v1263
    %v1466 = vpack.c.b16 %v1268, %v1266
    %v1467 = vpack.c.b16 %v1269, %v1267
    %v1468 = vpack.c.b16 %v1272, %v1270
    %v1469 = vpack.c.b16 %v1273, %v1271
    %v1470 = vpack.c.b16 %v1276, %v1274
    %v1471 = vpack.c.b16 %v1277, %v1275
    %v1472 = vpack.c.b16 %v1280, %v1278
    %v1473 = vpack.c.b16 %v1281, %v1279
    %v1474 = vpack.c.b16 %v1284, %v1282
    %v1475 = vpack.c.b16 %v1285, %v1283
    %v1476 = vpack.c.b16 %v1288, %v1286
    %v1477 = vpack.c.b16 %v1289, %v1287
    %v1478 = vpack.c.b16 %v1292, %v1290
    %v1479 = vpack.c.b16 %v1293, %v1291
    %v1480 = vpack.c.b16 %v1296, %v1294
    %v1481 = vpack.c.b16 %v1297, %v1295
    %v1482 = vpack.c.b16 %v1300, %v1298
    %v1483 = vpack.c.b16 %v1301, %v1299
    %v1484 = vpack.c.b16 %v1304, %v1302
    %v1485 = vpack.c.b16 %v1305, %v1303
    %v1486 = vpack.c.b16 %v1308, %v1306
    %v1487 = vpack.c.b16 %v1309, %v1307
    %v1488 = vpack.c.b16 %v1312, %v1310
    %v1489 = vpack.c.b16 %v1313, %v1311
    %v1490 = vpack.c.b16 %v1316, %v1314
    %v1491 = vpack.c.b16 %v1317, %v1315
    %v1492 = vpack.c.b16 %v1320, %v1318
    %v1493 = vpack.c.b16 %v1321, %v1319
    %v1494 = vpack.c.b16 %v1324, %v1322
    %v1495 = vpack.c.b16 %v1325, %v1323
    %v1496 = vpack.c.b16 %v1328, %v1326
    %v1497 = vpack.c.b16 %v1329, %v1327
    %v1498 = vpack.c.b16 %v1332, %v1330
    %v1499 = vpack.c.b16 %v1333, %v1331
    %v1500 = vpack.c.b16 %v1336, %v1334
    %v1501 = vpack.c.b16 %v1337, %v1335
    %v1502 = vpack.c.b16 %v1340, %v1338
    %v1503 = vpack.c.b16 %v1341, %v1339
    %v1504 = vpack.c.b16 %v1344, %v1342
    %v1505 = vpack.c.b16 %v1345, %v1343
    %v1506 = vpack.c.b16 %v1348, %v1346
    %v1507 = vpack.c.b16 %v1349, %v1347
    %v1508 = vpack.c.b16 %v1352, %v1350
    %v1509 = vpack.c.b16 %v1353, %v1351
    %v1510 = vpack.c.b16 %v1356, %v1354
    %v1511 = vpack.c.b16 %v1357, %v1355
    %v1512 = vpack.c.b16 %v1360, %v1358
    %v1513 = vpack.c.b16 %v1361, %v1359
    %v1514 = vpack.c.b16 %v1364, %v1362
    %v1515 = vpack.c.b16 %v1365, %v1363
    %v1516 = vpack.c.b16 %v1368, %v1366
    %v1517 = vpack.c.b16 %v1369, %v1367
    %v1518 = vpack.c.b16 %v1372, %v1370
    %v1519 = vpack.c.b16 %v1373, %v1371
    %v1520 = vpack.c.b16 %v1376, %v1374
    %v1521 = vpack.c.b16 %v1377, %v1375
    %v1522 = vpack.c.b16 %v1380, %v1378
    %v1523 = vpack.c.b16 %v1381, %v1379
    %v1524 = vpack.c.b16 %v1384, %v1382
    %v1525 = vpack.c.b16 %v1385, %v1383
    %v1526 = vpack.c.b16 %v1388, %v1386
    %v1527 = vpack.c.b16 %v1389, %v1387
    %v1528 = vpack.c.b16 %v1392, %v1390
    %v1529 = vpack.c.b16 %v1393, %v1391
    %v1530 = vpack.c.b16 %v1396, %v1394
    %v1531 = vpack.c.b16 %v1397, %v1395
    %v1532 = vpack.c.b16 %v1400, %v1398
    %v1533 = vpack.c.b16 %v1401, %v1399
    %v1534 = vpack.c.b16 %v1404, %v1402
    %v1535 = vpack.c.b16 %v1405, %v1403
    %v1536 = vpack.c.b16 %v1408, %v1406
    %v1537 = vpack.c.b16 %v1409, %v1407
    %v1538 = vpack.c.b16 %v1412, %v1410
    %v1539 = vpack.c.b16 %v1413, %v1411
    %v1540 = vpack.c.b16 %v1416, %v1414
    %v1541 = vpack.c.b16 %v1417, %v1415
    %v1542 = vpack.c.b16 %v1420, %v1418
    %v1543 = vpack.c.b16 %v1421, %v1419
    %v1544 = vpack.c.b16 %v1424, %v1422
    %v1545 = vpack.c.b16 %v1425, %v1423
    %v1546 = vpack.c.b16 %v1428, %v1426
    %v1547 = vpack.c.b16 %v1429, %v1427
    %v1548 = vpack.c.b16 %v1432, %v1430
    %v1549 = vpack.c.b16 %v1433, %v1431
    %v1550 = vpack.c.b16 %v1436, %v1434
    %v1551 = vpack.c.b16 %v1437, %v1435
    %v1552 = vpack.c.b16 %v1440, %v1438
    %v1553 = vpack.c.b16 %v1441, %v1439
    %1666 = vmatprep.subr.bf16.mxu0 %v1457
    %1667 = vmatpush1.bf16.msra.mxu0 %v1456
    %1668 = vmatprep.subr.bf16.mxu0 %v1455
    %1669 = vmatpush1.bf16.msra.mxu0 %v1454
    %1670 = vmatprep.subr.bf16.mxu0 %v1453
    %1671 = vmatpush1.bf16.msra.mxu0 %v1452
    %1672 = vmatprep.subr.bf16.mxu0 %v1451
    %1673 = vmatpush1.bf16.msra.mxu0 %v1450
    %1674 = vmatprep.subr.bf16.mxu0 %v1449
    %1675 = vmatpush1.bf16.msra.mxu0 %v1448
    %1676 = vmatprep.subr.bf16.mxu0 %v1447
    %1677 = vmatpush1.bf16.msra.mxu0 %v1446
    %1678 = vmatprep.subr.bf16.mxu0 %v1445
    %1679 = vmatpush1.bf16.msra.mxu0 %v1444
    %1680 = vmatprep.subr.bf16.mxu0 %v1443
    %1681 = vmatpush1.bf16.msra.mxu0 %v1442
    %1682 = vmatprep.subr.bf16.mxu0 %v1473
    %1683 = vmatpush2.bf16.msra.mxu0 %v1472
    %1684 = vmatprep.subr.bf16.mxu0 %v1471
    %1685 = vmatpush2.bf16.msra.mxu0 %v1470
    %1686 = vmatprep.subr.bf16.mxu0 %v1469
    %1687 = vmatpush2.bf16.msra.mxu0 %v1468
    %1688 = vmatprep.subr.bf16.mxu0 %v1467
    %1689 = vmatpush2.bf16.msra.mxu0 %v1466
    %1690 = vmatprep.subr.bf16.mxu0 %v1465
    %1691 = vmatpush2.bf16.msra.mxu0 %v1464
    %1692 = vmatprep.subr.bf16.mxu0 %v1463
    %1693 = vmatpush2.bf16.msra.mxu0 %v1462
    %1694 = vmatprep.subr.bf16.mxu0 %v1461
    %1695 = vmatpush2.bf16.msra.mxu0 %v1460
    %1696 = vmatprep.subr.bf16.mxu0 %v1459
    %1697 = vmatpush2.bf16.msra.mxu0 %v1458
    %1698 = vmatprep.mubr.bf16.mxu0 %v1093
    %1699 = vmatmul.mubr.bf16.gmra.mxu0 %v1092
    %v1700 = vpop.f32.mrf.mxu0
    %v1701 = vadd.f32 %v1074, %v1700
    %v1702 = vpop.f32.mrf.mxu0
    %v1703 = vadd.f32 %v1078, %v1702
    %v1704 = vpop.f32.mrf.mxu0
    %v1705 = vpop.f32.mrf.mxu0
    %1706 = vdwg.mxu0
    %1707 = vmatprep.subr.bf16.mxu0 %v1489
    %1708 = vmatpush1.bf16.msra.mxu0 %v1488
    %1709 = vmatprep.subr.bf16.mxu0 %v1487
    %1710 = vmatpush1.bf16.msra.mxu0 %v1486
    %1711 = vmatprep.subr.bf16.mxu0 %v1485
    %1712 = vmatpush1.bf16.msra.mxu0 %v1484
    %1713 = vmatprep.subr.bf16.mxu0 %v1483
    %1714 = vmatpush1.bf16.msra.mxu0 %v1482
    %1715 = vmatprep.subr.bf16.mxu0 %v1481
    %1716 = vmatpush1.bf16.msra.mxu0 %v1480
    %1717 = vmatprep.subr.bf16.mxu0 %v1479
    %1718 = vmatpush1.bf16.msra.mxu0 %v1478
    %1719 = vmatprep.subr.bf16.mxu0 %v1477
    %1720 = vmatpush1.bf16.msra.mxu0 %v1476
    %1721 = vmatprep.subr.bf16.mxu0 %v1475
    %1722 = vmatpush1.bf16.msra.mxu0 %v1474
    %1723 = vmatprep.subr.bf16.mxu0 %v1505
    %1724 = vmatpush2.bf16.msra.mxu0 %v1504
    %1725 = vmatprep.subr.bf16.mxu0 %v1503
    %1726 = vmatpush2.bf16.msra.mxu0 %v1502
    %1727 = vmatprep.subr.bf16.mxu0 %v1501
    %1728 = vmatpush2.bf16.msra.mxu0 %v1500
    %1729 = vmatprep.subr.bf16.mxu0 %v1499
    %1730 = vmatpush2.bf16.msra.mxu0 %v1498
    %1731 = vmatprep.subr.bf16.mxu0 %v1497
    %1732 = vmatpush2.bf16.msra.mxu0 %v1496
    %1733 = vmatprep.subr.bf16.mxu0 %v1495
    %1734 = vmatpush2.bf16.msra.mxu0 %v1494
    %1735 = vmatprep.subr.bf16.mxu0 %v1493
    %1736 = vmatpush2.bf16.msra.mxu0 %v1492
    %1737 = vmatprep.subr.bf16.mxu0 %v1491
    %1738 = vmatpush2.bf16.msra.mxu0 %v1490
    %1739 = vmatprep.mubr.bf16.mxu0 %v1095
    %1740 = vmatmul.mubr.bf16.gmra.mxu0 %v1094
    %v1741 = vpop.f32.mrf.mxu0
    %v1742 = vadd.f32 %v1701, %v1741
    %v1743 = vpop.f32.mrf.mxu0
    %v1744 = vadd.f32 %v1703, %v1743
    %v1745 = vpop.f32.mrf.mxu0
    %v1746 = vpop.f32.mrf.mxu0
    %1747 = vdwg.mxu0
    %1748 = vmatprep.subr.bf16.mxu0 %v1521
    %1749 = vmatpush1.bf16.msra.mxu0 %v1520
    %1750 = vmatprep.subr.bf16.mxu0 %v1519
    %1751 = vmatpush1.bf16.msra.mxu0 %v1518
    %1752 = vmatprep.subr.bf16.mxu0 %v1517
    %1753 = vmatpush1.bf16.msra.mxu0 %v1516
    %1754 = vmatprep.subr.bf16.mxu0 %v1515
    %1755 = vmatpush1.bf16.msra.mxu0 %v1514
    %1756 = vmatprep.subr.bf16.mxu0 %v1513
    %1757 = vmatpush1.bf16.msra.mxu0 %v1512
    %1758 = vmatprep.subr.bf16.mxu0 %v1511
    %1759 = vmatpush1.bf16.msra.mxu0 %v1510
    %1760 = vmatprep.subr.bf16.mxu0 %v1509
    %1761 = vmatpush1.bf16.msra.mxu0 %v1508
    %1762 = vmatprep.subr.bf16.mxu0 %v1507
    %1763 = vmatpush1.bf16.msra.mxu0 %v1506
    %1764 = vmatprep.subr.bf16.mxu0 %v1537
    %1765 = vmatpush2.bf16.msra.mxu0 %v1536
    %1766 = vmatprep.subr.bf16.mxu0 %v1535
    %1767 = vmatpush2.bf16.msra.mxu0 %v1534
    %1768 = vmatprep.subr.bf16.mxu0 %v1533
    %1769 = vmatpush2.bf16.msra.mxu0 %v1532
    %1770 = vmatprep.subr.bf16.mxu0 %v1531
    %1771 = vmatpush2.bf16.msra.mxu0 %v1530
    %1772 = vmatprep.subr.bf16.mxu0 %v1529
    %1773 = vmatpush2.bf16.msra.mxu0 %v1528
    %1774 = vmatprep.subr.bf16.mxu0 %v1527
    %1775 = vmatpush2.bf16.msra.mxu0 %v1526
    %1776 = vmatprep.subr.bf16.mxu0 %v1525
    %1777 = vmatpush2.bf16.msra.mxu0 %v1524
    %1778 = vmatprep.subr.bf16.mxu0 %v1523
    %1779 = vmatpush2.bf16.msra.mxu0 %v1522
    %1780 = vmatprep.mubr.bf16.mxu0 %v1097
    %1781 = vmatmul.mubr.bf16.gmra.mxu0 %v1096
    %v1782 = vpop.f32.mrf.mxu0
    %v1783 = vadd.f32 %v1742, %v1782
    %v1784 = vpop.f32.mrf.mxu0
    %v1785 = vadd.f32 %v1744, %v1784
    %v1786 = vpop.f32.mrf.mxu0
    %v1787 = vpop.f32.mrf.mxu0
    %1788 = vdwg.mxu0
    %1789 = vmatprep.subr.bf16.mxu0 %v1553
    %1790 = vmatpush1.bf16.msra.mxu0 %v1552
    %1791 = vmatprep.subr.bf16.mxu0 %v1551
    %1792 = vmatpush1.bf16.msra.mxu0 %v1550
    %1793 = vmatprep.subr.bf16.mxu0 %v1549
    %1794 = vmatpush1.bf16.msra.mxu0 %v1548
    %1795 = vmatprep.subr.bf16.mxu0 %v1547
    %1796 = vmatpush1.bf16.msra.mxu0 %v1546
    %1797 = vmatprep.subr.bf16.mxu0 %v1545
    %1798 = vmatpush1.bf16.msra.mxu0 %v1544
    %1799 = vmatprep.subr.bf16.mxu0 %v1543
    %1800 = vmatpush1.bf16.msra.mxu0 %v1542
    %1801 = vmatprep.subr.bf16.mxu0 %v1541
    %1802 = vmatpush1.bf16.msra.mxu0 %v1540
    %1803 = vmatprep.subr.bf16.mxu0 %v1539
    %1804 = vmatpush1.bf16.msra.mxu0 %v1538
    %1805 = vmatprep.subr.bf16.mxu0 0
    %1806 = vmatpush2.bf16.msra.mxu0 0
    %1807 = vmatprep.subr.bf16.mxu0 0
    %1808 = vmatpush2.bf16.msra.mxu0 0
    %1809 = vmatprep.subr.bf16.mxu0 0
    %1810 = vmatpush2.bf16.msra.mxu0 0
    %1811 = vmatprep.subr.bf16.mxu0 0
    %1812 = vmatpush2.bf16.msra.mxu0 0
    %1813 = vmatprep.subr.bf16.mxu0 0
    %1814 = vmatpush2.bf16.msra.mxu0 0
    %1815 = vmatprep.subr.bf16.mxu0 0
    %1816 = vmatpush2.bf16.msra.mxu0 0
    %1817 = vmatprep.subr.bf16.mxu0 0
    %1818 = vmatpush2.bf16.msra.mxu0 0
    %1819 = vmatprep.subr.bf16.mxu0 0
    %1820 = vmatpush2.bf16.msra.mxu0 0
    %1821 = vmatprep.mubr.bf16.mxu0 0
    %1822 = vmatmul.mubr.bf16.gmra.mxu0 %v1098
    %v1823 = vpop.f32.mrf.mxu0
    %v1824 = vadd.f32 %v1783, %v1823
    %v1825 = vpop.f32.mrf.mxu0
    %v1826 = vadd.f32 %v1785, %v1825
    %v1827 = vpop.f32.mrf.mxu0
    %v1828 = vpop.f32.mrf.mxu0
    %1829 = vdwg.mxu0
    %v1830 = vrsqrt.pop %v1824
    %v1831 = vmul.f32 %v1824, %v1830
    %vm1832 = vcmp.eq.f32.partialorder %v1824, inf
    %v1833 = vsel %vm1832, %v1824, %v1831
    %vm1834 = vcmp.eq.f32.partialorder %v1824, 0.0
    %v1835 = vand.u32 %v1824, 2147483648
    %v1836 = vsel %vm1834, %v1835, %v1833
    %v1837 = vrsqrt.pop %v1826
    %v1838 = vmul.f32 %v1826, %v1837
    %vm1839 = vcmp.eq.f32.partialorder %v1826, inf
    %v1840 = vsel %vm1839, %v1826, %v1838
    %vm1841 = vcmp.eq.f32.partialorder %v1826, 0.0
    %v1842 = vand.u32 %v1826, 2147483648
    %v1843 = vsel %vm1841, %v1842, %v1840
    %v1844 = vmul.f32 %v1836, %v71
    %v1845 = vmul.f32 %v1843, %v72
    %v1846 = vadd.f32 %v1060, %v1844
    %v1847 = vadd.f32 %v1062, %v1845
    %v1848 = vmax.f32 %v1846, 0.0
    %v1849 = vmax.f32 %v1847, 0.0
    %v1850 = vpack.c.bf16 %v1848, %v1848
    %v1851 = vpack.c.bf16 %v1849, %v1849
    %v1852 = vld [vmem:[#allocation4] sm:$0xff]
    %v1853 = vld [vmem:[#allocation4 + $0x10] sm:$0xff]
    %v1854 = vld [vmem:[#allocation4 + $0x20] sm:$0xff]
    %v1855 = vld [vmem:[#allocation4 + $0x30] sm:$0xff]
    %v1856 = vld [vmem:[#allocation4 + $0x40] sm:$0xff]
    %v1857 = vld [vmem:[#allocation4 + $0x50] sm:$0xff]
    %v1858 = vld [vmem:[#allocation4 + $0x60] sm:$0xff]
    %v1859 = vld [vmem:[#allocation4 + $0x70] sm:$0xff]
    %v1860 = vld [vmem:[#allocation4 + $0x80] sm:$0xff]
    %v1861 = vld [vmem:[#allocation4 + $0x90] sm:$0xff]
    %v1862 = vld [vmem:[#allocation4 + $0xa0] sm:$0xff]
    %v1863 = vld [vmem:[#allocation4 + $0xb0] sm:$0xff]
    %v1864 = vld [vmem:[#allocation4 + $0xc0] sm:$0xff]
    %v1865 = vld [vmem:[#allocation4 + $0xd0] sm:$0xff]
    %v1866 = vld [vmem:[#allocation4 + $0xe0] sm:$0xff]
    %v1867 = vld [vmem:[#allocation4 + $0xf0] sm:$0xff]
    %v1868 = vld [vmem:[#allocation4 + $0x100] sm:$0xff]
    %v1869 = vld [vmem:[#allocation4 + $0x110] sm:$0xff]
    %v1870 = vld [vmem:[#allocation4 + $0x120] sm:$0xff]
    %v1871 = vld [vmem:[#allocation4 + $0x130] sm:$0xff]
    %v1872 = vld [vmem:[#allocation4 + $0x140] sm:$0xff]
    %v1873 = vld [vmem:[#allocation4 + $0x150] sm:$0xff]
    %v1874 = vld [vmem:[#allocation4 + $0x160] sm:$0xff]
    %v1875 = vld [vmem:[#allocation4 + $0x170] sm:$0xff]
    %v1876 = vld [vmem:[#allocation4 + $0x180] sm:$0xff]
    %v1877 = vld [vmem:[#allocation4 + $0x190] sm:$0xff]
    %v1878 = vld [vmem:[#allocation4 + $0x1a0] sm:$0xff]
    %v1879 = vld [vmem:[#allocation4 + $0x1b0] sm:$0xff]
    %v1880 = vld [vmem:[#allocation4 + $0x1c0] sm:$0xff]
    %v1881 = vld [vmem:[#allocation4 + $0x1d0] sm:$0xff]
    %v1882 = vld [vmem:[#allocation4 + $0x1e0] sm:$0xff]
    %v1883 = vld [vmem:[#allocation4 + $0x1f0] sm:$0xff]
    %v1884 = vld [vmem:[#allocation4 + $0x8] sm:$0xff]
    %v1885 = vld [vmem:[#allocation4 + $0x18] sm:$0xff]
    %v1886 = vld [vmem:[#allocation4 + $0x28] sm:$0xff]
    %v1887 = vld [vmem:[#allocation4 + $0x38] sm:$0xff]
    %v1888 = vld [vmem:[#allocation4 + $0x48] sm:$0xff]
    %v1889 = vld [vmem:[#allocation4 + $0x58] sm:$0xff]
    %v1890 = vld [vmem:[#allocation4 + $0x68] sm:$0xff]
    %v1891 = vld [vmem:[#allocation4 + $0x78] sm:$0xff]
    %v1892 = vld [vmem:[#allocation4 + $0x88] sm:$0xff]
    %v1893 = vld [vmem:[#allocation4 + $0x98] sm:$0xff]
    %v1894 = vld [vmem:[#allocation4 + $0xa8] sm:$0xff]
    %v1895 = vld [vmem:[#allocation4 + $0xb8] sm:$0xff]
    %v1896 = vld [vmem:[#allocation4 + $0xc8] sm:$0xff]
    %v1897 = vld [vmem:[#allocation4 + $0xd8] sm:$0xff]
    %v1898 = vld [vmem:[#allocation4 + $0xe8] sm:$0xff]
    %v1899 = vld [vmem:[#allocation4 + $0xf8] sm:$0xff]
    %v1900 = vld [vmem:[#allocation4 + $0x108] sm:$0xff]
    %v1901 = vld [vmem:[#allocation4 + $0x118] sm:$0xff]
    %v1902 = vld [vmem:[#allocation4 + $0x128] sm:$0xff]
    %v1903 = vld [vmem:[#allocation4 + $0x138] sm:$0xff]
    %v1904 = vld [vmem:[#allocation4 + $0x148] sm:$0xff]
    %v1905 = vld [vmem:[#allocation4 + $0x158] sm:$0xff]
    %v1906 = vld [vmem:[#allocation4 + $0x168] sm:$0xff]
    %v1907 = vld [vmem:[#allocation4 + $0x178] sm:$0xff]
    %v1908 = vld [vmem:[#allocation4 + $0x188] sm:$0xff]
    %v1909 = vld [vmem:[#allocation4 + $0x198] sm:$0xff]
    %v1910 = vld [vmem:[#allocation4 + $0x1a8] sm:$0xff]
    %v1911 = vld [vmem:[#allocation4 + $0x1b8] sm:$0xff]
    %v1912 = vld [vmem:[#allocation4 + $0x1c8] sm:$0xff]
    %v1913 = vld [vmem:[#allocation4 + $0x1d8] sm:$0xff]
    %v1914 = vld [vmem:[#allocation4 + $0x1e8] sm:$0xff]
    %v1915 = vld [vmem:[#allocation4 + $0x1f8] sm:$0xff]
    %v1916 = vld [vmem:[%s4] sm:$0x3]
    %v1917 = vld [vmem:[%s4 + $0x2] sm:$0x3]
    %v1919 = vlaneseq
    %v1920 = vshrl.u32 %v1919, 7
    %v1921 = vsub.s32 0, %v1920
    %v1922 = vrot.slane %v1916, %v1921
    %v1923 = vlaneseq
    %v1924 = vshrl.u32 %v1923, 7
    %v1925 = vsub.s32 1, %v1924
    %v1926 = vrot.slane %v1916, %v1925
    %v1961 = vunpack.c.l.b16 %v1852
    %v1962 = vunpack.c.h.b16 %v1852
    %v1963 = vunpack.c.l.b16 %v1853
    %v1964 = vunpack.c.h.b16 %v1853
    %v1965 = vunpack.c.l.b16 %v1854
    %v1966 = vunpack.c.h.b16 %v1854
    %v1967 = vunpack.c.l.b16 %v1855
    %v1968 = vunpack.c.h.b16 %v1855
    %v1969 = vunpack.c.l.b16 %v1856
    %v1970 = vunpack.c.h.b16 %v1856
    %v1971 = vunpack.c.l.b16 %v1857
    %v1972 = vunpack.c.h.b16 %v1857
    %v1973 = vunpack.c.l.b16 %v1858
    %v1974 = vunpack.c.h.b16 %v1858
    %v1975 = vunpack.c.l.b16 %v1859
    %v1976 = vunpack.c.h.b16 %v1859
    %v1977 = vunpack.c.l.b16 %v1860
    %v1978 = vunpack.c.h.b16 %v1860
    %v1979 = vunpack.c.l.b16 %v1861
    %v1980 = vunpack.c.h.b16 %v1861
    %v1981 = vunpack.c.l.b16 %v1862
    %v1982 = vunpack.c.h.b16 %v1862
    %v1983 = vunpack.c.l.b16 %v1863
    %v1984 = vunpack.c.h.b16 %v1863
    %v1985 = vunpack.c.l.b16 %v1864
    %v1986 = vunpack.c.h.b16 %v1864
    %v1987 = vunpack.c.l.b16 %v1865
    %v1988 = vunpack.c.h.b16 %v1865
    %v1989 = vunpack.c.l.b16 %v1866
    %v1990 = vunpack.c.h.b16 %v1866
    %v1991 = vunpack.c.l.b16 %v1867
    %v1992 = vunpack.c.h.b16 %v1867
    %v1993 = vunpack.c.l.b16 %v1868
    %v1994 = vunpack.c.h.b16 %v1868
    %v1995 = vunpack.c.l.b16 %v1869
    %v1996 = vunpack.c.h.b16 %v1869
    %v1997 = vunpack.c.l.b16 %v1870
    %v1998 = vunpack.c.h.b16 %v1870
    %v1999 = vunpack.c.l.b16 %v1871
    %v2000 = vunpack.c.h.b16 %v1871
    %v2001 = vunpack.c.l.b16 %v1872
    %v2002 = vunpack.c.h.b16 %v1872
    %v2003 = vunpack.c.l.b16 %v1873
    %v2004 = vunpack.c.h.b16 %v1873
    %v2005 = vunpack.c.l.b16 %v1874
    %v2006 = vunpack.c.h.b16 %v1874
    %v2007 = vunpack.c.l.b16 %v1875
    %v2008 = vunpack.c.h.b16 %v1875
    %v2009 = vunpack.c.l.b16 %v1876
    %v2010 = vunpack.c.h.b16 %v1876
    %v2011 = vunpack.c.l.b16 %v1877
    %v2012 = vunpack.c.h.b16 %v1877
    %v2013 = vunpack.c.l.b16 %v1878
    %v2014 = vunpack.c.h.b16 %v1878
    %v2015 = vunpack.c.l.b16 %v1879
    %v2016 = vunpack.c.h.b16 %v1879
    %v2017 = vunpack.c.l.b16 %v1880
    %v2018 = vunpack.c.h.b16 %v1880
    %v2019 = vunpack.c.l.b16 %v1881
    %v2020 = vunpack.c.h.b16 %v1881
    %v2021 = vunpack.c.l.b16 %v1882
    %v2022 = vunpack.c.h.b16 %v1882
    %v2023 = vunpack.c.l.b16 %v1883
    %v2024 = vunpack.c.h.b16 %v1883
    %v2025 = vpack.c.b16 %v1963, %v1961
    %v2026 = vpack.c.b16 %v1964, %v1962
    %v2027 = vpack.c.b16 %v1967, %v1965
    %v2028 = vpack.c.b16 %v1968, %v1966
    %v2029 = vpack.c.b16 %v1971, %v1969
    %v2030 = vpack.c.b16 %v1972, %v1970
    %v2031 = vpack.c.b16 %v1975, %v1973
    %v2032 = vpack.c.b16 %v1976, %v1974
    %v2033 = vpack.c.b16 %v1979, %v1977
    %v2034 = vpack.c.b16 %v1980, %v1978
    %v2035 = vpack.c.b16 %v1983, %v1981
    %v2036 = vpack.c.b16 %v1984, %v1982
    %v2037 = vpack.c.b16 %v1987, %v1985
    %v2038 = vpack.c.b16 %v1988, %v1986
    %v2039 = vpack.c.b16 %v1991, %v1989
    %v2040 = vpack.c.b16 %v1992, %v1990
    %v2041 = vpack.c.b16 %v1995, %v1993
    %v2042 = vpack.c.b16 %v1996, %v1994
    %v2043 = vpack.c.b16 %v1999, %v1997
    %v2044 = vpack.c.b16 %v2000, %v1998
    %v2045 = vpack.c.b16 %v2003, %v2001
    %v2046 = vpack.c.b16 %v2004, %v2002
    %v2047 = vpack.c.b16 %v2007, %v2005
    %v2048 = vpack.c.b16 %v2008, %v2006
    %v2049 = vpack.c.b16 %v2011, %v2009
    %v2050 = vpack.c.b16 %v2012, %v2010
    %v2051 = vpack.c.b16 %v2015, %v2013
    %v2052 = vpack.c.b16 %v2016, %v2014
    %v2053 = vpack.c.b16 %v2019, %v2017
    %v2054 = vpack.c.b16 %v2020, %v2018
    %v2055 = vpack.c.b16 %v2023, %v2021
    %v2056 = vpack.c.b16 %v2024, %v2022
    %2089 = vmatprep.subr.bf16.mxu0 %v2040
    %2090 = vmatpush1.bf16.msra.mxu0 %v2039
    %2091 = vmatprep.subr.bf16.mxu0 %v2038
    %2092 = vmatpush1.bf16.msra.mxu0 %v2037
    %2093 = vmatprep.subr.bf16.mxu0 %v2036
    %2094 = vmatpush1.bf16.msra.mxu0 %v2035
    %2095 = vmatprep.subr.bf16.mxu0 %v2034
    %2096 = vmatpush1.bf16.msra.mxu0 %v2033
    %2097 = vmatprep.subr.bf16.mxu0 %v2032
    %2098 = vmatpush1.bf16.msra.mxu0 %v2031
    %2099 = vmatprep.subr.bf16.mxu0 %v2030
    %2100 = vmatpush1.bf16.msra.mxu0 %v2029
    %2101 = vmatprep.subr.bf16.mxu0 %v2028
    %2102 = vmatpush1.bf16.msra.mxu0 %v2027
    %2103 = vmatprep.subr.bf16.mxu0 %v2026
    %2104 = vmatpush1.bf16.msra.mxu0 %v2025
    %2105 = vmatprep.subr.bf16.mxu0 %v2056
    %2106 = vmatpush2.bf16.msra.mxu0 %v2055
    %2107 = vmatprep.subr.bf16.mxu0 %v2054
    %2108 = vmatpush2.bf16.msra.mxu0 %v2053
    %2109 = vmatprep.subr.bf16.mxu0 %v2052
    %2110 = vmatpush2.bf16.msra.mxu0 %v2051
    %2111 = vmatprep.subr.bf16.mxu0 %v2050
    %2112 = vmatpush2.bf16.msra.mxu0 %v2049
    %2113 = vmatprep.subr.bf16.mxu0 %v2048
    %2114 = vmatpush2.bf16.msra.mxu0 %v2047
    %2115 = vmatprep.subr.bf16.mxu0 %v2046
    %2116 = vmatpush2.bf16.msra.mxu0 %v2045
    %2117 = vmatprep.subr.bf16.mxu0 %v2044
    %2118 = vmatpush2.bf16.msra.mxu0 %v2043
    %2119 = vmatprep.subr.bf16.mxu0 %v2042
    %2120 = vmatpush2.bf16.msra.mxu0 %v2041
    %2121 = vmatprep.mubr.bf16.mxu0 %v1851
    %2122 = vmatmul.mubr.bf16.gmra.mxu0 %v1850
    %v2123 = vpop.f32.mrf.mxu0
    %v2124 = vadd.f32 %v1922, %v2123
    %v2125 = vpop.f32.mrf.mxu0
    %v2126 = vadd.f32 %v1926, %v2125
    %v2127 = vpop.f32.mrf.mxu0
    %v2128 = vpop.f32.mrf.mxu0
    %2129 = vdwg.mxu0
    %v2130 = vmul.bf16 %v1850, %v1850
    %v2131 = vmul.bf16 %v1851, %v1851
    %v2133 = vlaneseq
    %v2134 = vshrl.u32 %v2133, 7
    %v2135 = vsub.s32 0, %v2134
    %v2136 = vrot.slane %v1917, %v2135
    %v2137 = vlaneseq
    %v2138 = vshrl.u32 %v2137, 7
    %v2139 = vsub.s32 1, %v2138
    %v2140 = vrot.slane %v1917, %v2139
    %v2175 = vunpack.c.l.b16 %v1884
    %v2176 = vunpack.c.h.b16 %v1884
    %v2177 = vunpack.c.l.b16 %v1885
    %v2178 = vunpack.c.h.b16 %v1885
    %v2179 = vunpack.c.l.b16 %v1886
    %v2180 = vunpack.c.h.b16 %v1886
    %v2181 = vunpack.c.l.b16 %v1887
    %v2182 = vunpack.c.h.b16 %v1887
    %v2183 = vunpack.c.l.b16 %v1888
    %v2184 = vunpack.c.h.b16 %v1888
    %v2185 = vunpack.c.l.b16 %v1889
    %v2186 = vunpack.c.h.b16 %v1889
    %v2187 = vunpack.c.l.b16 %v1890
    %v2188 = vunpack.c.h.b16 %v1890
    %v2189 = vunpack.c.l.b16 %v1891
    %v2190 = vunpack.c.h.b16 %v1891
    %v2191 = vunpack.c.l.b16 %v1892
    %v2192 = vunpack.c.h.b16 %v1892
    %v2193 = vunpack.c.l.b16 %v1893
    %v2194 = vunpack.c.h.b16 %v1893
    %v2195 = vunpack.c.l.b16 %v1894
    %v2196 = vunpack.c.h.b16 %v1894
    %v2197 = vunpack.c.l.b16 %v1895
    %v2198 = vunpack.c.h.b16 %v1895
    %v2199 = vunpack.c.l.b16 %v1896
    %v2200 = vunpack.c.h.b16 %v1896
    %v2201 = vunpack.c.l.b16 %v1897
    %v2202 = vunpack.c.h.b16 %v1897
    %v2203 = vunpack.c.l.b16 %v1898
    %v2204 = vunpack.c.h.b16 %v1898
    %v2205 = vunpack.c.l.b16 %v1899
    %v2206 = vunpack.c.h.b16 %v1899
    %v2207 = vunpack.c.l.b16 %v1900
    %v2208 = vunpack.c.h.b16 %v1900
    %v2209 = vunpack.c.l.b16 %v1901
    %v2210 = vunpack.c.h.b16 %v1901
    %v2211 = vunpack.c.l.b16 %v1902
    %v2212 = vunpack.c.h.b16 %v1902
    %v2213 = vunpack.c.l.b16 %v1903
    %v2214 = vunpack.c.h.b16 %v1903
    %v2215 = vunpack.c.l.b16 %v1904
    %v2216 = vunpack.c.h.b16 %v1904
    %v2217 = vunpack.c.l.b16 %v1905
    %v2218 = vunpack.c.h.b16 %v1905
    %v2219 = vunpack.c.l.b16 %v1906
    %v2220 = vunpack.c.h.b16 %v1906
    %v2221 = vunpack.c.l.b16 %v1907
    %v2222 = vunpack.c.h.b16 %v1907
    %v2223 = vunpack.c.l.b16 %v1908
    %v2224 = vunpack.c.h.b16 %v1908
    %v2225 = vunpack.c.l.b16 %v1909
    %v2226 = vunpack.c.h.b16 %v1909
    %v2227 = vunpack.c.l.b16 %v1910
    %v2228 = vunpack.c.h.b16 %v1910
    %v2229 = vunpack.c.l.b16 %v1911
    %v2230 = vunpack.c.h.b16 %v1911
    %v2231 = vunpack.c.l.b16 %v1912
    %v2232 = vunpack.c.h.b16 %v1912
    %v2233 = vunpack.c.l.b16 %v1913
    %v2234 = vunpack.c.h.b16 %v1913
    %v2235 = vunpack.c.l.b16 %v1914
    %v2236 = vunpack.c.h.b16 %v1914
    %v2237 = vunpack.c.l.b16 %v1915
    %v2238 = vunpack.c.h.b16 %v1915
    %v2239 = vpack.c.b16 %v2177, %v2175
    %v2240 = vpack.c.b16 %v2178, %v2176
    %v2241 = vpack.c.b16 %v2181, %v2179
    %v2242 = vpack.c.b16 %v2182, %v2180
    %v2243 = vpack.c.b16 %v2185, %v2183
    %v2244 = vpack.c.b16 %v2186, %v2184
    %v2245 = vpack.c.b16 %v2189, %v2187
    %v2246 = vpack.c.b16 %v2190, %v2188
    %v2247 = vpack.c.b16 %v2193, %v2191
    %v2248 = vpack.c.b16 %v2194, %v2192
    %v2249 = vpack.c.b16 %v2197, %v2195
    %v2250 = vpack.c.b16 %v2198, %v2196
    %v2251 = vpack.c.b16 %v2201, %v2199
    %v2252 = vpack.c.b16 %v2202, %v2200
    %v2253 = vpack.c.b16 %v2205, %v2203
    %v2254 = vpack.c.b16 %v2206, %v2204
    %v2255 = vpack.c.b16 %v2209, %v2207
    %v2256 = vpack.c.b16 %v2210, %v2208
    %v2257 = vpack.c.b16 %v2213, %v2211
    %v2258 = vpack.c.b16 %v2214, %v2212
    %v2259 = vpack.c.b16 %v2217, %v2215
    %v2260 = vpack.c.b16 %v2218, %v2216
    %v2261 = vpack.c.b16 %v2221, %v2219
    %v2262 = vpack.c.b16 %v2222, %v2220
    %v2263 = vpack.c.b16 %v2225, %v2223
    %v2264 = vpack.c.b16 %v2226, %v2224
    %v2265 = vpack.c.b16 %v2229, %v2227
    %v2266 = vpack.c.b16 %v2230, %v2228
    %v2267 = vpack.c.b16 %v2233, %v2231
    %v2268 = vpack.c.b16 %v2234, %v2232
    %v2269 = vpack.c.b16 %v2237, %v2235
    %v2270 = vpack.c.b16 %v2238, %v2236
    %2303 = vmatprep.subr.bf16.mxu0 %v2254
    %2304 = vmatpush1.bf16.msra.mxu0 %v2253
    %2305 = vmatprep.subr.bf16.mxu0 %v2252
    %2306 = vmatpush1.bf16.msra.mxu0 %v2251
    %2307 = vmatprep.subr.bf16.mxu0 %v2250
    %2308 = vmatpush1.bf16.msra.mxu0 %v2249
    %2309 = vmatprep.subr.bf16.mxu0 %v2248
    %2310 = vmatpush1.bf16.msra.mxu0 %v2247
    %2311 = vmatprep.subr.bf16.mxu0 %v2246
    %2312 = vmatpush1.bf16.msra.mxu0 %v2245
    %2313 = vmatprep.subr.bf16.mxu0 %v2244
    %2314 = vmatpush1.bf16.msra.mxu0 %v2243
    %2315 = vmatprep.subr.bf16.mxu0 %v2242
    %2316 = vmatpush1.bf16.msra.mxu0 %v2241
    %2317 = vmatprep.subr.bf16.mxu0 %v2240
    %2318 = vmatpush1.bf16.msra.mxu0 %v2239
    %2319 = vmatprep.subr.bf16.mxu0 %v2270
    %2320 = vmatpush2.bf16.msra.mxu0 %v2269
    %2321 = vmatprep.subr.bf16.mxu0 %v2268
    %2322 = vmatpush2.bf16.msra.mxu0 %v2267
    %2323 = vmatprep.subr.bf16.mxu0 %v2266
    %2324 = vmatpush2.bf16.msra.mxu0 %v2265
    %2325 = vmatprep.subr.bf16.mxu0 %v2264
    %2326 = vmatpush2.bf16.msra.mxu0 %v2263
    %2327 = vmatprep.subr.bf16.mxu0 %v2262
    %2328 = vmatpush2.bf16.msra.mxu0 %v2261
    %2329 = vmatprep.subr.bf16.mxu0 %v2260
    %2330 = vmatpush2.bf16.msra.mxu0 %v2259
    %2331 = vmatprep.subr.bf16.mxu0 %v2258
    %2332 = vmatpush2.bf16.msra.mxu0 %v2257
    %2333 = vmatprep.subr.bf16.mxu0 %v2256
    %2334 = vmatpush2.bf16.msra.mxu0 %v2255
    %2335 = vmatprep.mubr.bf16.mxu0 %v2131
    %2336 = vmatmul.mubr.bf16.gmra.mxu0 %v2130
    %v2337 = vpop.f32.mrf.mxu0
    %v2338 = vadd.f32 %v2136, %v2337
    %v2339 = vpop.f32.mrf.mxu0
    %v2340 = vadd.f32 %v2140, %v2339
    %v2341 = vpop.f32.mrf.mxu0
    %v2342 = vpop.f32.mrf.mxu0
    %2343 = vdwg.mxu0
    %v2344 = vrsqrt.pop %v2338
    %v2345 = vmul.f32 %v2338, %v2344
    %vm2346 = vcmp.eq.f32.partialorder %v2338, inf
    %v2347 = vsel %vm2346, %v2338, %v2345
    %vm2348 = vcmp.eq.f32.partialorder %v2338, 0.0
    %v2349 = vand.u32 %v2338, 2147483648
    %v2350 = vsel %vm2348, %v2349, %v2347
    %v2351 = vrsqrt.pop %v2340
    %v2352 = vmul.f32 %v2340, %v2351
    %vm2353 = vcmp.eq.f32.partialorder %v2340, inf
    %v2354 = vsel %vm2353, %v2340, %v2352
    %vm2355 = vcmp.eq.f32.partialorder %v2340, 0.0
    %v2356 = vand.u32 %v2340, 2147483648
    %v2357 = vsel %vm2355, %v2356, %v2354
    %v2358 = vmul.f32 %v2350, %v73
    %v2359 = vmul.f32 %v2357, %v74
    %v2360 = vadd.f32 %v2124, %v2358
    %v2361 = vadd.f32 %v2126, %v2359
    %v2362 = vmax.f32 %v2360, 0.0
    %v2363 = vmax.f32 %v2361, 0.0
    %v2364 = vpack.c.bf16 %v2362, %v2362
    %v2365 = vpack.c.bf16 %v2363, %v2363
    %v2366 = vld [vmem:[#allocation6] sm:$0xf]
    %v2367 = vld [vmem:[#allocation6 + $0x8] sm:$0xf]
    %v2368 = vld [vmem:[#allocation6 + $0x10] sm:$0xf]
    %v2369 = vld [vmem:[#allocation6 + $0x18] sm:$0xf]
    %v2370 = vld [vmem:[#allocation6 + $0x20] sm:$0xf]
    %v2371 = vld [vmem:[#allocation6 + $0x28] sm:$0xf]
    %v2372 = vld [vmem:[#allocation6 + $0x30] sm:$0xf]
    %v2373 = vld [vmem:[#allocation6 + $0x38] sm:$0xf]
    %v2374 = vld [vmem:[#allocation6 + $0x40] sm:$0xf]
    %v2375 = vld [vmem:[#allocation6 + $0x48] sm:$0xf]
    %v2376 = vld [vmem:[#allocation6 + $0x50] sm:$0xf]
    %v2377 = vld [vmem:[#allocation6 + $0x58] sm:$0xf]
    %v2378 = vld [vmem:[#allocation6 + $0x60] sm:$0xf]
    %v2379 = vld [vmem:[#allocation6 + $0x68] sm:$0xf]
    %v2380 = vld [vmem:[#allocation6 + $0x70] sm:$0xf]
    %v2381 = vld [vmem:[#allocation6 + $0x78] sm:$0xf]
    %v2382 = vld [vmem:[#allocation6 + $0x80] sm:$0xf]
    %v2383 = vld [vmem:[#allocation6 + $0x88] sm:$0xf]
    %v2384 = vld [vmem:[#allocation6 + $0x90] sm:$0xf]
    %v2385 = vld [vmem:[#allocation6 + $0x98] sm:$0xf]
    %v2386 = vld [vmem:[#allocation6 + $0xa0] sm:$0xf]
    %v2387 = vld [vmem:[#allocation6 + $0xa8] sm:$0xf]
    %v2388 = vld [vmem:[#allocation6 + $0xb0] sm:$0xf]
    %v2389 = vld [vmem:[#allocation6 + $0xb8] sm:$0xf]
    %v2390 = vld [vmem:[#allocation6 + $0xc0] sm:$0xf]
    %v2391 = vld [vmem:[#allocation6 + $0xc8] sm:$0xf]
    %v2392 = vld [vmem:[#allocation6 + $0xd0] sm:$0xf]
    %v2393 = vld [vmem:[#allocation6 + $0xd8] sm:$0xf]
    %v2394 = vld [vmem:[#allocation6 + $0xe0] sm:$0xf]
    %v2395 = vld [vmem:[#allocation6 + $0xe8] sm:$0xf]
    %v2396 = vld [vmem:[#allocation6 + $0xf0] sm:$0xf]
    %v2397 = vld [vmem:[#allocation6 + $0xf8] sm:$0xf]
    %v2398 = vld [vmem:[#allocation6 + $0x4] sm:$0xf]
    %v2399 = vld [vmem:[#allocation6 + $0xc] sm:$0xf]
    %v2400 = vld [vmem:[#allocation6 + $0x14] sm:$0xf]
    %v2401 = vld [vmem:[#allocation6 + $0x1c] sm:$0xf]
    %v2402 = vld [vmem:[#allocation6 + $0x24] sm:$0xf]
    %v2403 = vld [vmem:[#allocation6 + $0x2c] sm:$0xf]
    %v2404 = vld [vmem:[#allocation6 + $0x34] sm:$0xf]
    %v2405 = vld [vmem:[#allocation6 + $0x3c] sm:$0xf]
    %v2406 = vld [vmem:[#allocation6 + $0x44] sm:$0xf]
    %v2407 = vld [vmem:[#allocation6 + $0x4c] sm:$0xf]
    %v2408 = vld [vmem:[#allocation6 + $0x54] sm:$0xf]
    %v2409 = vld [vmem:[#allocation6 + $0x5c] sm:$0xf]
    %v2410 = vld [vmem:[#allocation6 + $0x64] sm:$0xf]
    %v2411 = vld [vmem:[#allocation6 + $0x6c] sm:$0xf]
    %v2412 = vld [vmem:[#allocation6 + $0x74] sm:$0xf]
    %v2413 = vld [vmem:[#allocation6 + $0x7c] sm:$0xf]
    %v2414 = vld [vmem:[#allocation6 + $0x84] sm:$0xf]
    %v2415 = vld [vmem:[#allocation6 + $0x8c] sm:$0xf]
    %v2416 = vld [vmem:[#allocation6 + $0x94] sm:$0xf]
    %v2417 = vld [vmem:[#allocation6 + $0x9c] sm:$0xf]
    %v2418 = vld [vmem:[#allocation6 + $0xa4] sm:$0xf]
    %v2419 = vld [vmem:[#allocation6 + $0xac] sm:$0xf]
    %v2420 = vld [vmem:[#allocation6 + $0xb4] sm:$0xf]
    %v2421 = vld [vmem:[#allocation6 + $0xbc] sm:$0xf]
    %v2422 = vld [vmem:[#allocation6 + $0xc4] sm:$0xf]
    %v2423 = vld [vmem:[#allocation6 + $0xcc] sm:$0xf]
    %v2424 = vld [vmem:[#allocation6 + $0xd4] sm:$0xf]
    %v2425 = vld [vmem:[#allocation6 + $0xdc] sm:$0xf]
    %v2426 = vld [vmem:[#allocation6 + $0xe4] sm:$0xf]
    %v2427 = vld [vmem:[#allocation6 + $0xec] sm:$0xf]
    %v2428 = vld [vmem:[#allocation6 + $0xf4] sm:$0xf]
    %v2429 = vld [vmem:[#allocation6 + $0xfc] sm:$0xf]
    %v2430 = vld [vmem:[%s6] sm:$0x1]
    %v2431 = vld [vmem:[%s6 + $0x1] sm:$0x1]
    %v2433 = vlaneseq
    %v2434 = vshrl.u32 %v2433, 7
    %v2435 = vsub.s32 0, %v2434
    %v2436 = vrot.slane %v2430, %v2435
    %v2470 = vunpack.c.l.b16 %v2366
    %v2471 = vunpack.c.l.b16 %v2367
    %v2472 = vunpack.c.l.b16 %v2368
    %v2473 = vunpack.c.l.b16 %v2369
    %v2474 = vunpack.c.l.b16 %v2370
    %v2475 = vunpack.c.l.b16 %v2371
    %v2476 = vunpack.c.l.b16 %v2372
    %v2477 = vunpack.c.l.b16 %v2373
    %v2478 = vunpack.c.l.b16 %v2374
    %v2479 = vunpack.c.l.b16 %v2375
    %v2480 = vunpack.c.l.b16 %v2376
    %v2481 = vunpack.c.l.b16 %v2377
    %v2482 = vunpack.c.l.b16 %v2378
    %v2483 = vunpack.c.l.b16 %v2379
    %v2484 = vunpack.c.l.b16 %v2380
    %v2485 = vunpack.c.l.b16 %v2381
    %v2486 = vunpack.c.l.b16 %v2382
    %v2487 = vunpack.c.l.b16 %v2383
    %v2488 = vunpack.c.l.b16 %v2384
    %v2489 = vunpack.c.l.b16 %v2385
    %v2490 = vunpack.c.l.b16 %v2386
    %v2491 = vunpack.c.l.b16 %v2387
    %v2492 = vunpack.c.l.b16 %v2388
    %v2493 = vunpack.c.l.b16 %v2389
    %v2494 = vunpack.c.l.b16 %v2390
    %v2495 = vunpack.c.l.b16 %v2391
    %v2496 = vunpack.c.l.b16 %v2392
    %v2497 = vunpack.c.l.b16 %v2393
    %v2498 = vunpack.c.l.b16 %v2394
    %v2499 = vunpack.c.l.b16 %v2395
    %v2500 = vunpack.c.l.b16 %v2396
    %v2501 = vunpack.c.l.b16 %v2397
    %v2502 = vpack.c.b16 %v2471, %v2470
    %v2503 = vpack.c.b16 %v2473, %v2472
    %v2504 = vpack.c.b16 %v2475, %v2474
    %v2505 = vpack.c.b16 %v2477, %v2476
    %v2506 = vpack.c.b16 %v2479, %v2478
    %v2507 = vpack.c.b16 %v2481, %v2480
    %v2508 = vpack.c.b16 %v2483, %v2482
    %v2509 = vpack.c.b16 %v2485, %v2484
    %v2510 = vpack.c.b16 %v2487, %v2486
    %v2511 = vpack.c.b16 %v2489, %v2488
    %v2512 = vpack.c.b16 %v2491, %v2490
    %v2513 = vpack.c.b16 %v2493, %v2492
    %v2514 = vpack.c.b16 %v2495, %v2494
    %v2515 = vpack.c.b16 %v2497, %v2496
    %v2516 = vpack.c.b16 %v2499, %v2498
    %v2517 = vpack.c.b16 %v2501, %v2500
    %2534 = vmatprep.subr.bf16.mxu0 0
    %2535 = vmatpush1.bf16.msra.mxu0 %v2509
    %2536 = vmatprep.subr.bf16.mxu0 0
    %2537 = vmatpush1.bf16.msra.mxu0 %v2508
    %2538 = vmatprep.subr.bf16.mxu0 0
    %2539 = vmatpush1.bf16.msra.mxu0 %v2507
    %2540 = vmatprep.subr.bf16.mxu0 0
    %2541 = vmatpush1.bf16.msra.mxu0 %v2506
    %2542 = vmatprep.subr.bf16.mxu0 0
    %2543 = vmatpush1.bf16.msra.mxu0 %v2505
    %2544 = vmatprep.subr.bf16.mxu0 0
    %2545 = vmatpush1.bf16.msra.mxu0 %v2504
    %2546 = vmatprep.subr.bf16.mxu0 0
    %2547 = vmatpush1.bf16.msra.mxu0 %v2503
    %2548 = vmatprep.subr.bf16.mxu0 0
    %2549 = vmatpush1.bf16.msra.mxu0 %v2502
    %2550 = vmatprep.subr.bf16.mxu0 0
    %2551 = vmatpush2.bf16.msra.mxu0 %v2517
    %2552 = vmatprep.subr.bf16.mxu0 0
    %2553 = vmatpush2.bf16.msra.mxu0 %v2516
    %2554 = vmatprep.subr.bf16.mxu0 0
    %2555 = vmatpush2.bf16.msra.mxu0 %v2515
    %2556 = vmatprep.subr.bf16.mxu0 0
    %2557 = vmatpush2.bf16.msra.mxu0 %v2514
    %2558 = vmatprep.subr.bf16.mxu0 0
    %2559 = vmatpush2.bf16.msra.mxu0 %v2513
    %2560 = vmatprep.subr.bf16.mxu0 0
    %2561 = vmatpush2.bf16.msra.mxu0 %v2512
    %2562 = vmatprep.subr.bf16.mxu0 0
    %2563 = vmatpush2.bf16.msra.mxu0 %v2511
    %2564 = vmatprep.subr.bf16.mxu0 0
    %2565 = vmatpush2.bf16.msra.mxu0 %v2510
    %2566 = vmatprep.mubr.bf16.mxu0 %v2365
    %2567 = vmatmul.mubr.bf16.gmra.mxu0 %v2364
    %v2568 = vpop.f32.mrf.mxu0
    %v2569 = vadd.f32 %v2436, %v2568
    %v2570 = vpop.f32.mrf.mxu0
    %v2571 = vpop.f32.mrf.mxu0
    %v2572 = vpop.f32.mrf.mxu0
    %2573 = vdwg.mxu0
    %v2574 = vmul.bf16 %v2364, %v2364
    %v2575 = vmul.bf16 %v2365, %v2365
    %v2577 = vlaneseq
    %v2578 = vshrl.u32 %v2577, 7
    %v2579 = vsub.s32 0, %v2578
    %v2580 = vrot.slane %v2431, %v2579
    %v2614 = vunpack.c.l.b16 %v2398
    %v2615 = vunpack.c.l.b16 %v2399
    %v2616 = vunpack.c.l.b16 %v2400
    %v2617 = vunpack.c.l.b16 %v2401
    %v2618 = vunpack.c.l.b16 %v2402
    %v2619 = vunpack.c.l.b16 %v2403
    %v2620 = vunpack.c.l.b16 %v2404
    %v2621 = vunpack.c.l.b16 %v2405
    %v2622 = vunpack.c.l.b16 %v2406
    %v2623 = vunpack.c.l.b16 %v2407
    %v2624 = vunpack.c.l.b16 %v2408
    %v2625 = vunpack.c.l.b16 %v2409
    %v2626 = vunpack.c.l.b16 %v2410
    %v2627 = vunpack.c.l.b16 %v2411
    %v2628 = vunpack.c.l.b16 %v2412
    %v2629 = vunpack.c.l.b16 %v2413
    %v2630 = vunpack.c.l.b16 %v2414
    %v2631 = vunpack.c.l.b16 %v2415
    %v2632 = vunpack.c.l.b16 %v2416
    %v2633 = vunpack.c.l.b16 %v2417
    %v2634 = vunpack.c.l.b16 %v2418
    %v2635 = vunpack.c.l.b16 %v2419
    %v2636 = vunpack.c.l.b16 %v2420
    %v2637 = vunpack.c.l.b16 %v2421
    %v2638 = vunpack.c.l.b16 %v2422
    %v2639 = vunpack.c.l.b16 %v2423
    %v2640 = vunpack.c.l.b16 %v2424
    %v2641 = vunpack.c.l.b16 %v2425
    %v2642 = vunpack.c.l.b16 %v2426
    %v2643 = vunpack.c.l.b16 %v2427
    %v2644 = vunpack.c.l.b16 %v2428
    %v2645 = vunpack.c.l.b16 %v2429
    %v2646 = vpack.c.b16 %v2615, %v2614
    %v2647 = vpack.c.b16 %v2617, %v2616
    %v2648 = vpack.c.b16 %v2619, %v2618
    %v2649 = vpack.c.b16 %v2621, %v2620
    %v2650 = vpack.c.b16 %v2623, %v2622
    %v2651 = vpack.c.b16 %v2625, %v2624
    %v2652 = vpack.c.b16 %v2627, %v2626
    %v2653 = vpack.c.b16 %v2629, %v2628
    %v2654 = vpack.c.b16 %v2631, %v2630
    %v2655 = vpack.c.b16 %v2633, %v2632
    %v2656 = vpack.c.b16 %v2635, %v2634
    %v2657 = vpack.c.b16 %v2637, %v2636
    %v2658 = vpack.c.b16 %v2639, %v2638
    %v2659 = vpack.c.b16 %v2641, %v2640
    %v2660 = vpack.c.b16 %v2643, %v2642
    %v2661 = vpack.c.b16 %v2645, %v2644
    %2678 = vmatprep.subr.bf16.mxu0 0
    %2679 = vmatpush1.bf16.msra.mxu0 %v2653
    %2680 = vmatprep.subr.bf16.mxu0 0
    %2681 = vmatpush1.bf16.msra.mxu0 %v2652
    %2682 = vmatprep.subr.bf16.mxu0 0
    %2683 = vmatpush1.bf16.msra.mxu0 %v2651
    %2684 = vmatprep.subr.bf16.mxu0 0
    %2685 = vmatpush1.bf16.msra.mxu0 %v2650
    %2686 = vmatprep.subr.bf16.mxu0 0
    %2687 = vmatpush1.bf16.msra.mxu0 %v2649
    %2688 = vmatprep.subr.bf16.mxu0 0
    %2689 = vmatpush1.bf16.msra.mxu0 %v2648
    %2690 = vmatprep.subr.bf16.mxu0 0
    %2691 = vmatpush1.bf16.msra.mxu0 %v2647
    %2692 = vmatprep.subr.bf16.mxu0 0
    %2693 = vmatpush1.bf16.msra.mxu0 %v2646
    %2694 = vmatprep.subr.bf16.mxu0 0
    %2695 = vmatpush2.bf16.msra.mxu0 %v2661
    %2696 = vmatprep.subr.bf16.mxu0 0
    %2697 = vmatpush2.bf16.msra.mxu0 %v2660
    %2698 = vmatprep.subr.bf16.mxu0 0
    %2699 = vmatpush2.bf16.msra.mxu0 %v2659
    %2700 = vmatprep.subr.bf16.mxu0 0
    %2701 = vmatpush2.bf16.msra.mxu0 %v2658
    %2702 = vmatprep.subr.bf16.mxu0 0
    %2703 = vmatpush2.bf16.msra.mxu0 %v2657
    %2704 = vmatprep.subr.bf16.mxu0 0
    %2705 = vmatpush2.bf16.msra.mxu0 %v2656
    %2706 = vmatprep.subr.bf16.mxu0 0
    %2707 = vmatpush2.bf16.msra.mxu0 %v2655
    %2708 = vmatprep.subr.bf16.mxu0 0
    %2709 = vmatpush2.bf16.msra.mxu0 %v2654
    %2710 = vmatprep.mubr.bf16.mxu0 %v2575
    %2711 = vmatmul.mubr.bf16.gmra.mxu0 %v2574
    %v2712 = vpop.f32.mrf.mxu0
    %v2713 = vadd.f32 %v2580, %v2712
    %v2714 = vpop.f32.mrf.mxu0
    %v2715 = vpop.f32.mrf.mxu0
    %v2716 = vpop.f32.mrf.mxu0
    %2717 = vdwg.mxu0
    %v2718 = vrsqrt.pop %v2713
    %v2719 = vmul.f32 %v2713, %v2718
    %vm2720 = vcmp.eq.f32.partialorder %v2713, inf
    %v2721 = vsel %vm2720, %v2713, %v2719
    %vm2722 = vcmp.eq.f32.partialorder %v2713, 0.0
    %v2723 = vand.u32 %v2713, 2147483648
    %v2724 = vsel %vm2722, %v2723, %v2721
    %v2725 = vmul.f32 %v2724, %v75
    %v2726 = vadd.f32 %v2569, %v2725
    %2727 = vst [vmem:[%s8] sm:$0xff] %v2726
    // Predicated region
    $region46: #{_forward_impl.1} parent=1 // pred_check
      _
    $region47: #{_forward_impl.1} parent=1 // pred_check_branch
      %2729 = sbr.rel (0) target = $region49
    $region48: #{_forward_impl.1} parent=1 // pred_region
      _
    $region49: #{_forward_impl.1} parent=1 // pred_fallthru
      _
    // Predicated region
    $region50: #{_forward_impl.1} parent=1 // pred_check
      _
    $region51: #{_forward_impl.1} parent=1 // pred_check_branch
      %2731 = sbr.rel (0) target = $region53
    $region52: #{_forward_impl.1} parent=1 // pred_region
      _
    $region53: #{_forward_impl.1} parent=1 // pred_fallthru
      _
    %2732 = vsyncpa [#allocation3], 1
    %2733 = vsyncpa [#allocation5], 1

</llo_original>
